<compile_context>
chip_gen: v7x
topology: tpu7x:2x2x1
jax: 0.10.0
libtpu: 0.0.40
codegen_flags: <defaults>
</compile_context>

<pallas_src>
import functools

import jax
import jax.numpy as jnp
from jax import lax
from jax.experimental import pallas as pl
from jax.experimental.pallas import tpu as pltpu


def _round_up(x, m):
    return ((x + m - 1) // m) * m


# ----------------------------- Pallas kernel ------------------------------- #
def _link_prediction_kernel(x_ref, a_ref, w1_ref, w2_ref, w3_ref,
                            ssrc_ref, sdst_ref, z_ref, logit_ref,
                            *, eps, n_real):
    """Fused forward: PairNorm -> GCN1 -> ReLU -> PairNorm -> GCN2 -> ReLU
    -> PairNorm -> GCN3 -> decode (edge gather + dot)."""
    inv_n = 1.0 / float(n_real)

    def pairnorm(x):
        # One-pass statistics.  Padded rows of x are exactly zero, so full-tile
        # sums equal sums over the real rows; divide by the real node count.
        s1 = jnp.sum(x, axis=0, keepdims=True)          # [1, F]
        s2 = jnp.sum(x * x, axis=0, keepdims=True)      # [1, F]
        mean = s1 * inv_n
        var = s2 * inv_n - mean * mean                  # E[x^2] - mean^2
        inv_std = lax.rsqrt(var + eps)                  # EUP rsqrt, no divide
        return (x - mean) * inv_std                     # scale = 1

    adj = a_ref[...]                                    # bf16 [Np, Np]

    def gcn(x_f32, w_bf16):
        # Both matmuls on the MXU in bf16 with f32 accumulation.
        support = jnp.dot(x_f32.astype(jnp.bfloat16), w_bf16,
                          preferred_element_type=jnp.float32)
        return jnp.dot(adj, support.astype(jnp.bfloat16),
                       preferred_element_type=jnp.float32)

    x = x_ref[...]                                      # f32 [Np, F]

    x = gcn(pairnorm(x), w1_ref[...])
    x = jnp.maximum(x, 0.0)
    x = gcn(pairnorm(x), w2_ref[...])
    x = jnp.maximum(x, 0.0)
    z = gcn(pairnorm(x), w3_ref[...])                   # f32 [Np, H]

    z_ref[...] = z.astype(z_ref.dtype)

    # Fused decode(): gather edge endpoints via exact one-hot selection matmuls
    # (f32, tiny), then a row-wise dot product.
    z_src = jnp.dot(ssrc_ref[...], z, preferred_element_type=jnp.float32)
    z_dst = jnp.dot(sdst_ref[...], z, preferred_element_type=jnp.float32)
    logit_ref[...] = jnp.sum(z_src * z_dst, axis=1, keepdims=True)


def link_prediction_forward(x, A, w1, w2, w3, decode_edge_index, *, eps=1e-5):
    """Pad the node/edge axes to lane-dense multiples of 128, cast the matmul
    operands to bf16, and run the whole problem as one full-array-block
    pallas_call."""
    n_real, f = x.shape
    hidden = w3.shape[1]
    n_pad = _round_up(n_real, 128)
    n_edges = decode_edge_index.shape[1]
    e_pad = _round_up(n_edges, 128)

    # Zero-pad node axis (rows beyond n_real stay exactly zero).
    x_p = jnp.zeros((n_pad, f), jnp.float32).at[:n_real, :].set(x)
    a_p = (jnp.zeros((n_pad, n_pad), jnp.float32)
           .at[:n_real, :n_real].set(A)
           .astype(jnp.bfloat16))
    w1_b = w1.astype(jnp.bfloat16)
    w2_b = w2.astype(jnp.bfloat16)
    w3_b = w3.astype(jnp.bfloat16)

    # One-hot edge-endpoint selection matrices (padded edge rows stay zero).
    rows = jnp.arange(n_edges, dtype=jnp.int32)
    sel_src = (jnp.zeros((e_pad, n_pad), jnp.float32)
               .at[rows, decode_edge_index[0]].set(1.0))
    sel_dst = (jnp.zeros((e_pad, n_pad), jnp.float32)
               .at[rows, decode_edge_index[1]].set(1.0))

    full = lambda shape: pl.BlockSpec(shape, lambda: (0,) * len(shape),
                                      memory_space=pltpu.MemorySpace.VMEM)

    z_pad, logits_pad = pl.pallas_call(
        functools.partial(_link_prediction_kernel, eps=eps, n_real=n_real),
        out_shape=(jax.ShapeDtypeStruct((n_pad, hidden), jnp.float32),
                   jax.ShapeDtypeStruct((e_pad, 1), jnp.float32)),
        grid=(),
        in_specs=[
            full(x_p.shape),
            full(a_p.shape),
            full(w1_b.shape),
            full(w2_b.shape),
            full(w3_b.shape),
            full(sel_src.shape),
            full(sel_dst.shape),
        ],
        out_specs=(full((n_pad, hidden)), full((e_pad, 1))),
    )(x_p, a_p, w1_b, w2_b, w3_b, sel_src, sel_dst)

    return z_pad[:n_real], logits_pad[:n_edges, 0]


# ------------------------- parameter / graph setup ------------------------- #
def xavier_uniform(key, fan_in, fan_out):
    bound = jnp.sqrt(6.0 / (fan_in + fan_out))
    return jax.random.uniform(key, (fan_in, fan_out), jnp.float32, -bound, bound)


def edge_index_to_adjacency_matrix(edge_index, num_nodes):
    src, dst = edge_index[0], edge_index[1]
    return jnp.zeros((num_nodes, num_nodes), jnp.float32).at[src, dst].set(1.0)


def build_normalized_adjacency(edge_index, num_nodes):
    adj = edge_index_to_adjacency_matrix(edge_index, num_nodes)
    adj = adj + jnp.eye(num_nodes, dtype=jnp.float32)
    d = jnp.power(jnp.sum(adj, axis=1), -0.5)
    return (d[:, None] * adj) * d[None, :]          # D @ adj @ D


# ------------------------------ references --------------------------------- #
def reference_forward(x, A, w1, w2, w3, eps=1e-5):
    def pairnorm(v):
        mean = v.mean(axis=0, keepdims=True)
        var = ((v - mean) ** 2).mean(axis=0, keepdims=True)
        return (v - mean) / jnp.sqrt(var + eps)

    h = pairnorm(x)
    h = jnp.maximum(A @ (h @ w1), 0.0)
    h = pairnorm(h)
    h = jnp.maximum(A @ (h @ w2), 0.0)
    h = pairnorm(h)
    return A @ (h @ w3)


def reference_decode(z, edge_index):
    return jnp.sum(z[edge_index[0]] * z[edge_index[1]], axis=-1)


# --------------------------------- main ------------------------------------ #
if __name__ == "__main__":
    key = jax.random.PRNGKey(0)
    k_x, k_e, k_w1, k_w2, k_w3, k_n1, k_n2 = jax.random.split(key, 7)

    num_nodes = 64          # N (graph nodes; padded to 128 inside the wrapper)
    num_features = 128      # input feature dim
    hidden_channels = 128   # hidden dim

    # Deterministic synthetic graph: a ring (both directions) + random extras.
    ring_src = jnp.arange(num_nodes, dtype=jnp.int32)
    ring_dst = (ring_src + 1) % num_nodes
    rnd_src = jax.random.randint(k_e, (2 * num_nodes,), 0, num_nodes, jnp.int32)
    rnd_dst = jnp.roll(rnd_src, 7)
    src = jnp.concatenate([ring_src, ring_dst, rnd_src])
    dst = jnp.concatenate([ring_dst, ring_src, rnd_dst])
    edge_index = jnp.stack([src, dst], axis=0)

    A = build_normalized_adjacency(edge_index, num_nodes)

    # Deterministic xavier-uniform weights (GCNConv has no bias).
    w1 = xavier_uniform(k_w1, num_features, hidden_channels)
    w2 = xavier_uniform(k_w2, hidden_channels, hidden_channels)
    w3 = xavier_uniform(k_w3, hidden_channels, hidden_channels)

    x = jax.random.normal(k_x, (num_nodes, num_features), jnp.float32)

    # decode() edge set: positive = ring edges, negative = random pairs.
    pos_edge_index = edge_index[:, :num_nodes]
    neg_src = jax.random.randint(k_n1, (num_nodes,), 0, num_nodes, jnp.int32)
    neg_dst = jax.random.randint(k_n2, (num_nodes,), 0, num_nodes, jnp.int32)
    decode_edge_index = jnp.concatenate(
        [pos_edge_index, jnp.stack([neg_src, neg_dst], axis=0)], axis=1)

    z, logits = link_prediction_forward(x, A, w1, w2, w3, decode_edge_index)
    z, logits = jax.block_until_ready((z, logits))

    # f32 pure-JAX reference of the module semantics (kernel uses bf16 MXU
    # inputs with f32 accumulation, so compare with a loosened tolerance).
    z_ref = reference_forward(x, A, w1, w2, w3)
    logits_ref = reference_decode(z_ref, decode_edge_index)

    rel = lambda a, b: float(jnp.linalg.norm(a - b) /
                             (jnp.linalg.norm(b) + 1e-12))

    assert z.shape == (num_nodes, hidden_channels)
    assert logits.shape == (decode_edge_index.shape[1],)
    assert rel(z, z_ref) < 5e-2, f"z mismatch vs reference: rel={rel(z, z_ref)}"
    assert rel(logits, logits_ref) < 5e-2, \
        f"logits mismatch vs reference: rel={rel(logits, logits_ref)}"

    print("KERNEL_OK")
</pallas_src>

<mosaic_0001>
module attributes {stable_mosaic.version = 11 : i64} {
  func.func @_link_prediction_kernel(%arg0: memref<128x128xf32, #tpu.memory_space<vmem>>, %arg1: memref<128x128xbf16, #tpu.memory_space<vmem>>, %arg2: memref<128x128xbf16, #tpu.memory_space<vmem>>, %arg3: memref<128x128xbf16, #tpu.memory_space<vmem>>, %arg4: memref<128x128xbf16, #tpu.memory_space<vmem>>, %arg5: memref<128x128xf32, #tpu.memory_space<vmem>>, %arg6: memref<128x128xf32, #tpu.memory_space<vmem>>, %arg7: memref<128x128xf32, #tpu.memory_space<vmem>>, %arg8: memref<128x1xf32, #tpu.memory_space<vmem>>) attributes {dimension_semantics = [], scalar_prefetch = 0 : i64, scratch_operands = 0 : i64, tpu.core_type = #tpu.core_type<tc>} {
    %c0 = arith.constant 0 : index
    %c0_0 = arith.constant 0 : index
    %0 = vector.load %arg1[%c0, %c0_0] : memref<128x128xbf16, #tpu.memory_space<vmem>>, vector<128x128xbf16>
    %c0_1 = arith.constant 0 : index
    %c0_2 = arith.constant 0 : index
    %1 = vector.load %arg0[%c0_1, %c0_2] : memref<128x128xf32, #tpu.memory_space<vmem>>, vector<128x128xf32>
    %cst = arith.constant dense<0.000000e+00> : vector<128xf32>
    %2 = vector.multi_reduction <add>, %1, %cst [0] : vector<128x128xf32> to vector<128xf32>
    %3 = vector.shape_cast %2 : vector<128xf32> to vector<1x128xf32>
    %4 = arith.mulf %1, %1 : vector<128x128xf32>
    %cst_3 = arith.constant dense<0.000000e+00> : vector<128xf32>
    %5 = vector.multi_reduction <add>, %4, %cst_3 [0] : vector<128x128xf32> to vector<128xf32>
    %6 = vector.shape_cast %5 : vector<128xf32> to vector<1x128xf32>
    %cst_4 = arith.constant 1.562500e-02 : f32
    %7 = vector.broadcast %cst_4 : f32 to vector<1x128xf32>
    %8 = arith.mulf %3, %7 : vector<1x128xf32>
    %cst_5 = arith.constant 1.562500e-02 : f32
    %9 = vector.broadcast %cst_5 : f32 to vector<1x128xf32>
    %10 = arith.mulf %6, %9 : vector<1x128xf32>
    %11 = arith.mulf %8, %8 : vector<1x128xf32>
    %12 = arith.subf %10, %11 : vector<1x128xf32>
    %cst_6 = arith.constant 9.99999974E-6 : f32
    %13 = vector.broadcast %cst_6 : f32 to vector<1x128xf32>
    %14 = arith.addf %12, %13 : vector<1x128xf32>
    %15 = math.rsqrt %14 : vector<1x128xf32>
    %16 = vector.broadcast %8 : vector<1x128xf32> to vector<128x128xf32>
    %17 = arith.subf %1, %16 : vector<128x128xf32>
    %18 = vector.broadcast %15 : vector<1x128xf32> to vector<128x128xf32>
    %19 = arith.mulf %17, %18 : vector<128x128xf32>
    %c0_7 = arith.constant 0 : index
    %c0_8 = arith.constant 0 : index
    %20 = vector.load %arg2[%c0_7, %c0_8] : memref<128x128xbf16, #tpu.memory_space<vmem>>, vector<128x128xbf16>
    %21 = arith.truncf %19 : vector<128x128xf32> to vector<128x128xbf16>
    %cst_9 = arith.constant dense<0.000000e+00> : vector<128x128xf32>
    %22 = tpu.matmul %21, %20, %cst_9 {dimension_numbers = #tpu.dot_dimension_numbers<[1], [0], [0], [1], [0, 0, 1, 1], [], []>} : vector<128x128xbf16>, vector<128x128xbf16>, vector<128x128xf32> -> vector<128x128xf32>
    %23 = arith.truncf %22 : vector<128x128xf32> to vector<128x128xbf16>
    %cst_10 = arith.constant dense<0.000000e+00> : vector<128x128xf32>
    %24 = tpu.matmul %0, %23, %cst_10 {dimension_numbers = #tpu.dot_dimension_numbers<[1], [0], [0], [1], [0, 0, 1, 1], [], []>} : vector<128x128xbf16>, vector<128x128xbf16>, vector<128x128xf32> -> vector<128x128xf32>
    %cst_11 = arith.constant 0.000000e+00 : f32
    %25 = vector.broadcast %cst_11 : f32 to vector<128x128xf32>
    %26 = arith.maximumf %24, %25 : vector<128x128xf32>
    %cst_12 = arith.constant dense<0.000000e+00> : vector<128xf32>
    %27 = vector.multi_reduction <add>, %26, %cst_12 [0] : vector<128x128xf32> to vector<128xf32>
    %28 = vector.shape_cast %27 : vector<128xf32> to vector<1x128xf32>
    %29 = arith.mulf %26, %26 : vector<128x128xf32>
    %cst_13 = arith.constant dense<0.000000e+00> : vector<128xf32>
    %30 = vector.multi_reduction <add>, %29, %cst_13 [0] : vector<128x128xf32> to vector<128xf32>
    %31 = vector.shape_cast %30 : vector<128xf32> to vector<1x128xf32>
    %cst_14 = arith.constant 1.562500e-02 : f32
    %32 = vector.broadcast %cst_14 : f32 to vector<1x128xf32>
    %33 = arith.mulf %28, %32 : vector<1x128xf32>
    %cst_15 = arith.constant 1.562500e-02 : f32
    %34 = vector.broadcast %cst_15 : f32 to vector<1x128xf32>
    %35 = arith.mulf %31, %34 : vector<1x128xf32>
    %36 = arith.mulf %33, %33 : vector<1x128xf32>
    %37 = arith.subf %35, %36 : vector<1x128xf32>
    %cst_16 = arith.constant 9.99999974E-6 : f32
    %38 = vector.broadcast %cst_16 : f32 to vector<1x128xf32>
    %39 = arith.addf %37, %38 : vector<1x128xf32>
    %40 = math.rsqrt %39 : vector<1x128xf32>
    %41 = vector.broadcast %33 : vector<1x128xf32> to vector<128x128xf32>
    %42 = arith.subf %26, %41 : vector<128x128xf32>
    %43 = vector.broadcast %40 : vector<1x128xf32> to vector<128x128xf32>
    %44 = arith.mulf %42, %43 : vector<128x128xf32>
    %c0_17 = arith.constant 0 : index
    %c0_18 = arith.constant 0 : index
    %45 = vector.load %arg3[%c0_17, %c0_18] : memref<128x128xbf16, #tpu.memory_space<vmem>>, vector<128x128xbf16>
    %46 = arith.truncf %44 : vector<128x128xf32> to vector<128x128xbf16>
    %cst_19 = arith.constant dense<0.000000e+00> : vector<128x128xf32>
    %47 = tpu.matmul %46, %45, %cst_19 {dimension_numbers = #tpu.dot_dimension_numbers<[1], [0], [0], [1], [0, 0, 1, 1], [], []>} : vector<128x128xbf16>, vector<128x128xbf16>, vector<128x128xf32> -> vector<128x128xf32>
    %48 = arith.truncf %47 : vector<128x128xf32> to vector<128x128xbf16>
    %cst_20 = arith.constant dense<0.000000e+00> : vector<128x128xf32>
    %49 = tpu.matmul %0, %48, %cst_20 {dimension_numbers = #tpu.dot_dimension_numbers<[1], [0], [0], [1], [0, 0, 1, 1], [], []>} : vector<128x128xbf16>, vector<128x128xbf16>, vector<128x128xf32> -> vector<128x128xf32>
    %cst_21 = arith.constant 0.000000e+00 : f32
    %50 = vector.broadcast %cst_21 : f32 to vector<128x128xf32>
    %51 = arith.maximumf %49, %50 : vector<128x128xf32>
    %cst_22 = arith.constant dense<0.000000e+00> : vector<128xf32>
    %52 = vector.multi_reduction <add>, %51, %cst_22 [0] : vector<128x128xf32> to vector<128xf32>
    %53 = vector.shape_cast %52 : vector<128xf32> to vector<1x128xf32>
    %54 = arith.mulf %51, %51 : vector<128x128xf32>
    %cst_23 = arith.constant dense<0.000000e+00> : vector<128xf32>
    %55 = vector.multi_reduction <add>, %54, %cst_23 [0] : vector<128x128xf32> to vector<128xf32>
    %56 = vector.shape_cast %55 : vector<128xf32> to vector<1x128xf32>
    %cst_24 = arith.constant 1.562500e-02 : f32
    %57 = vector.broadcast %cst_24 : f32 to vector<1x128xf32>
    %58 = arith.mulf %53, %57 : vector<1x128xf32>
    %cst_25 = arith.constant 1.562500e-02 : f32
    %59 = vector.broadcast %cst_25 : f32 to vector<1x128xf32>
    %60 = arith.mulf %56, %59 : vector<1x128xf32>
    %61 = arith.mulf %58, %58 : vector<1x128xf32>
    %62 = arith.subf %60, %61 : vector<1x128xf32>
    %cst_26 = arith.constant 9.99999974E-6 : f32
    %63 = vector.broadcast %cst_26 : f32 to vector<1x128xf32>
    %64 = arith.addf %62, %63 : vector<1x128xf32>
    %65 = math.rsqrt %64 : vector<1x128xf32>
    %66 = vector.broadcast %58 : vector<1x128xf32> to vector<128x128xf32>
    %67 = arith.subf %51, %66 : vector<128x128xf32>
    %68 = vector.broadcast %65 : vector<1x128xf32> to vector<128x128xf32>
    %69 = arith.mulf %67, %68 : vector<128x128xf32>
    %c0_27 = arith.constant 0 : index
    %c0_28 = arith.constant 0 : index
    %70 = vector.load %arg4[%c0_27, %c0_28] : memref<128x128xbf16, #tpu.memory_space<vmem>>, vector<128x128xbf16>
    %71 = arith.truncf %69 : vector<128x128xf32> to vector<128x128xbf16>
    %cst_29 = arith.constant dense<0.000000e+00> : vector<128x128xf32>
    %72 = tpu.matmul %71, %70, %cst_29 {dimension_numbers = #tpu.dot_dimension_numbers<[1], [0], [0], [1], [0, 0, 1, 1], [], []>} : vector<128x128xbf16>, vector<128x128xbf16>, vector<128x128xf32> -> vector<128x128xf32>
    %73 = arith.truncf %72 : vector<128x128xf32> to vector<128x128xbf16>
    %cst_30 = arith.constant dense<0.000000e+00> : vector<128x128xf32>
    %74 = tpu.matmul %0, %73, %cst_30 {dimension_numbers = #tpu.dot_dimension_numbers<[1], [0], [0], [1], [0, 0, 1, 1], [], []>} : vector<128x128xbf16>, vector<128x128xbf16>, vector<128x128xf32> -> vector<128x128xf32>
    %c0_31 = arith.constant 0 : index
    %c0_32 = arith.constant 0 : index
    %75 = vector.load %arg7[%c0_31, %c0_32] : memref<128x128xf32, #tpu.memory_space<vmem>>, vector<128x128xf32>
    tpu.vector_store %arg7[%c0_31, %c0_32], %74 {strides = array<i32>} : memref<128x128xf32, #tpu.memory_space<vmem>>, vector<128x128xf32>,
    %c0_33 = arith.constant 0 : index
    %c0_34 = arith.constant 0 : index
    %76 = vector.load %arg5[%c0_33, %c0_34] : memref<128x128xf32, #tpu.memory_space<vmem>>, vector<128x128xf32>
    %cst_35 = arith.constant dense<0.000000e+00> : vector<128x128xf32>
    %77 = tpu.matmul %76, %74, %cst_35 {dimension_numbers = #tpu.dot_dimension_numbers<[1], [0], [0], [1], [0, 0, 1, 1], [], []>} : vector<128x128xf32>, vector<128x128xf32>, vector<128x128xf32> -> vector<128x128xf32>
    %c0_36 = arith.constant 0 : index
    %c0_37 = arith.constant 0 : index
    %78 = vector.load %arg6[%c0_36, %c0_37] : memref<128x128xf32, #tpu.memory_space<vmem>>, vector<128x128xf32>
    %cst_38 = arith.constant dense<0.000000e+00> : vector<128x128xf32>
    %79 = tpu.matmul %78, %74, %cst_38 {dimension_numbers = #tpu.dot_dimension_numbers<[1], [0], [0], [1], [0, 0, 1, 1], [], []>} : vector<128x128xf32>, vector<128x128xf32>, vector<128x128xf32> -> vector<128x128xf32>
    %80 = arith.mulf %77, %79 : vector<128x128xf32>
    %cst_39 = arith.constant dense<0.000000e+00> : vector<128xf32>
    %81 = vector.multi_reduction <add>, %80, %cst_39 [1] : vector<128x128xf32> to vector<128xf32>
    %82 = vector.shape_cast %81 : vector<128xf32> to vector<128x1xf32>
    %c0_40 = arith.constant 0 : index
    %c0_41 = arith.constant 0 : index
    %83 = vector.load %arg8[%c0_40, %c0_41] : memref<128x1xf32, #tpu.memory_space<vmem>>, vector<128x1xf32>
    tpu.vector_store %arg8[%c0_40, %c0_41], %82 {strides = array<i32>} : memref<128x1xf32, #tpu.memory_space<vmem>>, vector<128x1xf32>,
    return
  }
}

</mosaic_0001>

<llo_original>
// kernel: tpu_custom_call.1
$region0: #{tpu_custom_call.1}
  #allocation0 [shape = 'u32[]', space=smem, size = 0x4, offset = 0x4, fixed_abs, tag = 'smem constant byte address 0x4 - core index']
  #allocation1 [shape = 'u32[144,128]{1,0:T(1,128)}', space=vmem, size = 0x12000, scoped, tag = 'internal scratch']
  %s0 = inlined_call_operand.hbm [shape: f32[128,128], index: 0, kind: input, shape index: {}]
  %s1 = inlined_call_operand.hbm [shape: bf16[128,128], index: 1, kind: input, shape index: {}]
  %s2 = inlined_call_operand.hbm [shape: bf16[128,128], index: 2, kind: input, shape index: {}]
  %s3 = inlined_call_operand.hbm [shape: bf16[128,128], index: 3, kind: input, shape index: {}]
  %s4 = inlined_call_operand.hbm [shape: bf16[128,128], index: 4, kind: input, shape index: {}]
  %s5 = inlined_call_operand.hbm [shape: f32[128,128], index: 5, kind: input, shape index: {}]
  %s6 = inlined_call_operand.hbm [shape: f32[128,128], index: 6, kind: input, shape index: {}]
  %s7 = inlined_call_operand.hbm [shape: f32[128,128], index: 7, kind: output, shape index: {0}]
  %s8 = inlined_call_operand.vmem [shape: f32[128,1], index: 8, kind: output, shape index: {1}]
  %9 = xla_tuple %s7, %s8
  %s10 = sld [smem:[#allocation0]]
  $region74: #{tpu_custom_call.1} parent=0
    _
  %s12 = ssub.s32 1, %s10
  %s13 = scalar_select 0, %s12, %s10
  $region1: #{tpu_custom_call.1} parent=0
    #allocation2 [shape = 'u8[65536]{0}', space=vmem, size = 0x10000, scoped, tag = 'input window, operand 0, single buffered']
    #allocation3 [shape = 's32[1]{0}', space=sflag, size = 0x4, scoped, tag = 'scoped memory for tpu_custom_call.1']
    #allocation4 [shape = 's32[1]{0}', space=sflag, size = 0x4, scoped, tag = 'scoped memory for tpu_custom_call.1']
    #allocation5 [shape = 'u8[32768]{0}', space=vmem, size = 0x8000, scoped, tag = 'input window, operand 1, single buffered']
    #allocation6 [shape = 's32[1]{0}', space=sflag, size = 0x4, scoped, tag = 'scoped memory for tpu_custom_call.1']
    #allocation7 [shape = 'u8[32768]{0}', space=vmem, size = 0x8000, scoped, tag = 'input window, operand 2, single buffered']
    #allocation8 [shape = 'u8[32768]{0}', space=vmem, size = 0x8000, scoped, tag = 'input window, operand 3, single buffered']
    #allocation9 [shape = 's32[1]{0}', space=sflag, size = 0x4, scoped, tag = 'scoped memory for tpu_custom_call.1']
    #allocation10 [shape = 'u8[32768]{0}', space=vmem, size = 0x8000, scoped, tag = 'input window, operand 4, single buffered']
    #allocation11 [shape = 'u8[65536]{0}', space=vmem, size = 0x10000, scoped, tag = 'input window, operand 5, single buffered']
    #allocation12 [shape = 's32[1]{0}', space=sflag, size = 0x4, scoped, tag = 'scoped memory for tpu_custom_call.1']
    #allocation13 [shape = 'u8[65536]{0}', space=vmem, size = 0x10000, scoped, tag = 'input window, operand 6, single buffered']
    #allocation14 [shape = 'u8[65536]{0}', space=vmem, size = 0x10000, scoped, tag = 'output window, operand 0, single buffered']
    %14 = vsyncpa [#allocation3], 0
    %15 = vsyncpa [#allocation6], 0
    %16 = vsyncpa [#allocation9], 0
    %17 = vsyncpa [#allocation12], 0
    %18 = vsyncpa [#allocation4], 0
    // Predicated region
    $region2: #{tpu_custom_call.1} parent=1 // pred_check
      _
    $region3: #{tpu_custom_call.1} parent=1 // pred_check_branch
      %20 = sbr.rel (0) target = $region5
    $region4: #{tpu_custom_call.1} parent=1 // pred_region
      %s22 = ssub.s32 2048, 2048
      %23 = vsyncadd [#allocation3], %s22
      %s24 = sshll.u32 [#allocation2], 4
      %s25 = int_to_ptr.vmem [resolvable:$true] %s24
      %30 = dma.hbm_to_vmem [thread:$0]  %s0, 2048, %s25, [#allocation3], 128, 128, 8
    $region5: #{tpu_custom_call.1} parent=1 // pred_fallthru
      _
    // Predicated region
    $region6: #{tpu_custom_call.1} parent=1 // pred_check
      _
    $region7: #{tpu_custom_call.1} parent=1 // pred_check_branch
      %32 = sbr.rel (0) target = $region9
    $region8: #{tpu_custom_call.1} parent=1 // pred_region
      %s34 = ssub.s32 1024, 1024
      %35 = vsyncadd [#allocation6], %s34
      %s36 = sshll.u32 [#allocation5], 4
      %s37 = int_to_ptr.vmem [resolvable:$true] %s36
      %42 = dma.hbm_to_vmem [thread:$0]  %s1, 1024, %s37, [#allocation6], 64, 64, 4
    $region9: #{tpu_custom_call.1} parent=1 // pred_fallthru
      _
    // Predicated region
    $region10: #{tpu_custom_call.1} parent=1 // pred_check
      _
    $region11: #{tpu_custom_call.1} parent=1 // pred_check_branch
      %44 = sbr.rel (0) target = $region13
    $region12: #{tpu_custom_call.1} parent=1 // pred_region
      %s46 = ssub.s32 1024, 1024
      %47 = vsyncadd [#allocation6], %s46
      %s48 = sshll.u32 [#allocation7], 4
      %s49 = int_to_ptr.vmem [resolvable:$true] %s48
      %54 = dma.hbm_to_vmem [thread:$0]  %s2, 1024, %s49, [#allocation6], 64, 64, 4
    $region13: #{tpu_custom_call.1} parent=1 // pred_fallthru
      _
    // Predicated region
    $region14: #{tpu_custom_call.1} parent=1 // pred_check
      _
    $region15: #{tpu_custom_call.1} parent=1 // pred_check_branch
      %56 = sbr.rel (0) target = $region17
    $region16: #{tpu_custom_call.1} parent=1 // pred_region
      %s58 = ssub.s32 1024, 1024
      %59 = vsyncadd [#allocation9], %s58
      %s60 = sshll.u32 [#allocation8], 4
      %s61 = int_to_ptr.vmem [resolvable:$true] %s60
      %66 = dma.hbm_to_vmem [thread:$0]  %s3, 1024, %s61, [#allocation9], 64, 64, 4
    $region17: #{tpu_custom_call.1} parent=1 // pred_fallthru
      _
    // Predicated region
    $region18: #{tpu_custom_call.1} parent=1 // pred_check
      _
    $region19: #{tpu_custom_call.1} parent=1 // pred_check_branch
      %68 = sbr.rel (0) target = $region21
    $region20: #{tpu_custom_call.1} parent=1 // pred_region
      %s70 = ssub.s32 1024, 1024
      %71 = vsyncadd [#allocation9], %s70
      %s72 = sshll.u32 [#allocation10], 4
      %s73 = int_to_ptr.vmem [resolvable:$true] %s72
      %78 = dma.hbm_to_vmem [thread:$0]  %s4, 1024, %s73, [#allocation9], 64, 64, 4
    $region21: #{tpu_custom_call.1} parent=1 // pred_fallthru
      _
    // Predicated region
    $region22: #{tpu_custom_call.1} parent=1 // pred_check
      _
    $region23: #{tpu_custom_call.1} parent=1 // pred_check_branch
      %80 = sbr.rel (0) target = $region25
    $region24: #{tpu_custom_call.1} parent=1 // pred_region
      %s82 = ssub.s32 2048, 2048
      %83 = vsyncadd [#allocation12], %s82
      %s84 = sshll.u32 [#allocation11], 4
      %s85 = int_to_ptr.vmem [resolvable:$true] %s84
      %90 = dma.hbm_to_vmem [thread:$0]  %s5, 2048, %s85, [#allocation12], 128, 128, 8
    $region25: #{tpu_custom_call.1} parent=1 // pred_fallthru
      _
    // Predicated region
    $region26: #{tpu_custom_call.1} parent=1 // pred_check
      _
    $region27: #{tpu_custom_call.1} parent=1 // pred_check_branch
      %92 = sbr.rel (0) target = $region29
    $region28: #{tpu_custom_call.1} parent=1 // pred_region
      %s94 = ssub.s32 2048, 2048
      %95 = vsyncadd [#allocation12], %s94
      %s96 = sshll.u32 [#allocation13], 4
      %s97 = int_to_ptr.vmem [resolvable:$true] %s96
      %102 = dma.hbm_to_vmem [thread:$0]  %s6, 2048, %s97, [#allocation12], 128, 128, 8
    $region29: #{tpu_custom_call.1} parent=1 // pred_fallthru
      _
    // Predicated region
    $region30: #{tpu_custom_call.1} parent=1 // pred_check
      _
    $region31: #{tpu_custom_call.1} parent=1 // pred_check_branch
      %104 = sbr.rel (0) target = $region33
    $region32: #{tpu_custom_call.1} parent=1 // pred_region
      %105 = dma.done [#allocation3], 2048
    $region33: #{tpu_custom_call.1} parent=1 // pred_fallthru
      _
    // Predicated region
    $region34: #{tpu_custom_call.1} parent=1 // pred_check
      _
    $region35: #{tpu_custom_call.1} parent=1 // pred_check_branch
      %107 = sbr.rel (0) target = $region37
    $region36: #{tpu_custom_call.1} parent=1 // pred_region
      %108 = dma.done [#allocation6], 1024
    $region37: #{tpu_custom_call.1} parent=1 // pred_fallthru
      _
    // Predicated region
    $region38: #{tpu_custom_call.1} parent=1 // pred_check
      _
    $region39: #{tpu_custom_call.1} parent=1 // pred_check_branch
      %110 = sbr.rel (0) target = $region41
    $region40: #{tpu_custom_call.1} parent=1 // pred_region
      %111 = dma.done [#allocation6], 1024
    $region41: #{tpu_custom_call.1} parent=1 // pred_fallthru
      _
    // Predicated region
    $region42: #{tpu_custom_call.1} parent=1 // pred_check
      _
    $region43: #{tpu_custom_call.1} parent=1 // pred_check_branch
      %113 = sbr.rel (0) target = $region45
    $region44: #{tpu_custom_call.1} parent=1 // pred_region
      %114 = dma.done [#allocation9], 1024
    $region45: #{tpu_custom_call.1} parent=1 // pred_fallthru
      _
    // Predicated region
    $region46: #{tpu_custom_call.1} parent=1 // pred_check
      _
    $region47: #{tpu_custom_call.1} parent=1 // pred_check_branch
      %116 = sbr.rel (0) target = $region49
    $region48: #{tpu_custom_call.1} parent=1 // pred_region
      %117 = dma.done [#allocation9], 1024
    $region49: #{tpu_custom_call.1} parent=1 // pred_fallthru
      _
    // Predicated region
    $region50: #{tpu_custom_call.1} parent=1 // pred_check
      _
    $region51: #{tpu_custom_call.1} parent=1 // pred_check_branch
      %119 = sbr.rel (0) target = $region53
    $region52: #{tpu_custom_call.1} parent=1 // pred_region
      %120 = dma.done [#allocation12], 2048
    $region53: #{tpu_custom_call.1} parent=1 // pred_fallthru
      _
    // Predicated region
    $region54: #{tpu_custom_call.1} parent=1 // pred_check
      _
    $region55: #{tpu_custom_call.1} parent=1 // pred_check_branch
      %122 = sbr.rel (0) target = $region57
    $region56: #{tpu_custom_call.1} parent=1 // pred_region
      %123 = dma.done [#allocation12], 2048
    $region57: #{tpu_custom_call.1} parent=1 // pred_fallthru
      _
    %v125 = vld [vmem:[#allocation5] sm:$0xf]
    %v126 = vld [vmem:[#allocation5 + $0x4] sm:$0xf]
    %v127 = vld [vmem:[#allocation5 + $0x8] sm:$0xf]
    %v128 = vld [vmem:[#allocation5 + $0xc] sm:$0xf]
    %v129 = vld [vmem:[#allocation5 + $0x10] sm:$0xf]
    %v130 = vld [vmem:[#allocation5 + $0x14] sm:$0xf]
    %v131 = vld [vmem:[#allocation5 + $0x18] sm:$0xf]
    %v132 = vld [vmem:[#allocation5 + $0x1c] sm:$0xf]
    %v133 = vld [vmem:[#allocation5 + $0x20] sm:$0xf]
    %v134 = vld [vmem:[#allocation5 + $0x24] sm:$0xf]
    %v135 = vld [vmem:[#allocation5 + $0x28] sm:$0xf]
    %v136 = vld [vmem:[#allocation5 + $0x2c] sm:$0xf]
    %v137 = vld [vmem:[#allocation5 + $0x30] sm:$0xf]
    %v138 = vld [vmem:[#allocation5 + $0x34] sm:$0xf]
    %v139 = vld [vmem:[#allocation5 + $0x38] sm:$0xf]
    %v140 = vld [vmem:[#allocation5 + $0x3c] sm:$0xf]
    %v141 = vld [vmem:[#allocation2] sm:$0xff]
    %v142 = vld [vmem:[#allocation2 + $0x8] sm:$0xff]
    %v143 = vld [vmem:[#allocation2 + $0x10] sm:$0xff]
    %v144 = vld [vmem:[#allocation2 + $0x18] sm:$0xff]
    %v145 = vld [vmem:[#allocation2 + $0x20] sm:$0xff]
    %v146 = vld [vmem:[#allocation2 + $0x28] sm:$0xff]
    %v147 = vld [vmem:[#allocation2 + $0x30] sm:$0xff]
    %v148 = vld [vmem:[#allocation2 + $0x38] sm:$0xff]
    %v149 = vld [vmem:[#allocation2 + $0x40] sm:$0xff]
    %v150 = vld [vmem:[#allocation2 + $0x48] sm:$0xff]
    %v151 = vld [vmem:[#allocation2 + $0x50] sm:$0xff]
    %v152 = vld [vmem:[#allocation2 + $0x58] sm:$0xff]
    %v153 = vld [vmem:[#allocation2 + $0x60] sm:$0xff]
    %v154 = vld [vmem:[#allocation2 + $0x68] sm:$0xff]
    %v155 = vld [vmem:[#allocation2 + $0x70] sm:$0xff]
    %v156 = vld [vmem:[#allocation2 + $0x78] sm:$0xff]
    %v157 = vadd.f32 %v141, %v142
    %v158 = vadd.f32 %v157, %v143
    %v159 = vadd.f32 %v158, %v144
    %v160 = vadd.f32 %v159, %v145
    %v161 = vadd.f32 %v160, %v146
    %v162 = vadd.f32 %v161, %v147
    %v163 = vadd.f32 %v162, %v148
    %v164 = vadd.f32 %v163, %v149
    %v165 = vadd.f32 %v164, %v150
    %v166 = vadd.f32 %v165, %v151
    %v167 = vadd.f32 %v166, %v152
    %v168 = vadd.f32 %v167, %v153
    %v169 = vadd.f32 %v168, %v154
    %v170 = vadd.f32 %v169, %v155
    %v171 = vadd.f32 %v170, %v156
    %v172 = vrot.slane %v171, 4
    %v173 = vadd.f32 %v171, %v172
    %v174 = vrot.slane %v173, 2
    %v175 = vadd.f32 %v173, %v174
    %v176 = vrot.slane %v175, 1
    %v177 = vadd.f32 %v175, %v176
    %v178 = vmul.f32 %v141, %v141
    %v179 = vmul.f32 %v142, %v142
    %v180 = vmul.f32 %v143, %v143
    %v181 = vmul.f32 %v144, %v144
    %v182 = vmul.f32 %v145, %v145
    %v183 = vmul.f32 %v146, %v146
    %v184 = vmul.f32 %v147, %v147
    %v185 = vmul.f32 %v148, %v148
    %v186 = vmul.f32 %v149, %v149
    %v187 = vmul.f32 %v150, %v150
    %v188 = vmul.f32 %v151, %v151
    %v189 = vmul.f32 %v152, %v152
    %v190 = vmul.f32 %v153, %v153
    %v191 = vmul.f32 %v154, %v154
    %v192 = vmul.f32 %v155, %v155
    %v193 = vmul.f32 %v156, %v156
    %v194 = vadd.f32 %v178, %v179
    %v195 = vadd.f32 %v194, %v180
    %v196 = vadd.f32 %v195, %v181
    %v197 = vadd.f32 %v196, %v182
    %v198 = vadd.f32 %v197, %v183
    %v199 = vadd.f32 %v198, %v184
    %v200 = vadd.f32 %v199, %v185
    %v201 = vadd.f32 %v200, %v186
    %v202 = vadd.f32 %v201, %v187
    %v203 = vadd.f32 %v202, %v188
    %v204 = vadd.f32 %v203, %v189
    %v205 = vadd.f32 %v204, %v190
    %v206 = vadd.f32 %v205, %v191
    %v207 = vadd.f32 %v206, %v192
    %v208 = vadd.f32 %v207, %v193
    %v209 = vrot.slane %v208, 4
    %v210 = vadd.f32 %v208, %v209
    %v211 = vrot.slane %v210, 2
    %v212 = vadd.f32 %v210, %v211
    %v213 = vrot.slane %v212, 1
    %v214 = vadd.f32 %v212, %v213
    %v215 = vmul.f32 %v177, 0.015625
    %v216 = vmul.f32 %v214, 0.015625
    %v217 = vmul.f32 %v215, %v215
    %v218 = vsub.f32 %v216, %v217
    %v219 = vadd.f32 %v218, 1e-05
    %v220 = vrsqrt.pop %v219
    %v221 = vsub.f32 %v141, %v215
    %v222 = vsub.f32 %v142, %v215
    %v223 = vsub.f32 %v143, %v215
    %v224 = vsub.f32 %v144, %v215
    %v225 = vsub.f32 %v145, %v215
    %v226 = vsub.f32 %v146, %v215
    %v227 = vsub.f32 %v147, %v215
    %v228 = vsub.f32 %v148, %v215
    %v229 = vsub.f32 %v149, %v215
    %v230 = vsub.f32 %v150, %v215
    %v231 = vsub.f32 %v151, %v215
    %v232 = vsub.f32 %v152, %v215
    %v233 = vsub.f32 %v153, %v215
    %v234 = vsub.f32 %v154, %v215
    %v235 = vsub.f32 %v155, %v215
    %v236 = vsub.f32 %v156, %v215
    %v237 = vmul.f32 %v221, %v220
    %v238 = vmul.f32 %v222, %v220
    %v239 = vmul.f32 %v223, %v220
    %v240 = vmul.f32 %v224, %v220
    %v241 = vmul.f32 %v225, %v220
    %v242 = vmul.f32 %v226, %v220
    %v243 = vmul.f32 %v227, %v220
    %v244 = vmul.f32 %v228, %v220
    %v245 = vmul.f32 %v229, %v220
    %v246 = vmul.f32 %v230, %v220
    %v247 = vmul.f32 %v231, %v220
    %v248 = vmul.f32 %v232, %v220
    %v249 = vmul.f32 %v233, %v220
    %v250 = vmul.f32 %v234, %v220
    %v251 = vmul.f32 %v235, %v220
    %v252 = vmul.f32 %v236, %v220
    %v253 = vld [vmem:[#allocation7] sm:$0xf]
    %v254 = vld [vmem:[#allocation7 + $0x4] sm:$0xf]
    %v255 = vld [vmem:[#allocation7 + $0x8] sm:$0xf]
    %v256 = vld [vmem:[#allocation7 + $0xc] sm:$0xf]
    %v257 = vld [vmem:[#allocation7 + $0x10] sm:$0xf]
    %v258 = vld [vmem:[#allocation7 + $0x14] sm:$0xf]
    %v259 = vld [vmem:[#allocation7 + $0x18] sm:$0xf]
    %v260 = vld [vmem:[#allocation7 + $0x1c] sm:$0xf]
    %v261 = vld [vmem:[#allocation7 + $0x20] sm:$0xf]
    %v262 = vld [vmem:[#allocation7 + $0x24] sm:$0xf]
    %v263 = vld [vmem:[#allocation7 + $0x28] sm:$0xf]
    %v264 = vld [vmem:[#allocation7 + $0x2c] sm:$0xf]
    %v265 = vld [vmem:[#allocation7 + $0x30] sm:$0xf]
    %v266 = vld [vmem:[#allocation7 + $0x34] sm:$0xf]
    %v267 = vld [vmem:[#allocation7 + $0x38] sm:$0xf]
    %v268 = vld [vmem:[#allocation7 + $0x3c] sm:$0xf]
    %v269 = vpack.c.bf16 %v238, %v237
    %v270 = vpack.c.bf16 %v240, %v239
    %v271 = vpack.c.bf16 %v242, %v241
    %v272 = vpack.c.bf16 %v244, %v243
    %v273 = vpack.c.bf16 %v246, %v245
    %v274 = vpack.c.bf16 %v248, %v247
    %v275 = vpack.c.bf16 %v250, %v249
    %v276 = vpack.c.bf16 %v252, %v251
    %v293 = vunpack.c.l.b16 %v253
    %v294 = vunpack.c.l.b16 %v254
    %v295 = vunpack.c.l.b16 %v255
    %v296 = vunpack.c.l.b16 %v256
    %v297 = vunpack.c.l.b16 %v257
    %v298 = vunpack.c.l.b16 %v258
    %v299 = vunpack.c.l.b16 %v259
    %v300 = vunpack.c.l.b16 %v260
    %v301 = vunpack.c.l.b16 %v261
    %v302 = vunpack.c.l.b16 %v262
    %v303 = vunpack.c.l.b16 %v263
    %v304 = vunpack.c.l.b16 %v264
    %v305 = vunpack.c.l.b16 %v265
    %v306 = vunpack.c.l.b16 %v266
    %v307 = vunpack.c.l.b16 %v267
    %v308 = vunpack.c.l.b16 %v268
    %v309 = vpack.c.b16 %v294, %v293
    %v310 = vpack.c.b16 %v296, %v295
    %v311 = vpack.c.b16 %v298, %v297
    %v312 = vpack.c.b16 %v300, %v299
    %v313 = vpack.c.b16 %v302, %v301
    %v314 = vpack.c.b16 %v304, %v303
    %v315 = vpack.c.b16 %v306, %v305
    %v316 = vpack.c.b16 %v308, %v307
    %325 = vmatprep.subr.bf16.mxu0 0
    %326 = vmatpush1.bf16.msra.mxu0 %v309
    %327 = vmatprep.subr.bf16.mxu0 0
    %328 = vmatpush1.bf16.msra.mxu0 %v310
    %329 = vmatprep.subr.bf16.mxu0 0
    %330 = vmatpush1.bf16.msra.mxu0 %v311
    %331 = vmatprep.subr.bf16.mxu0 0
    %332 = vmatpush1.bf16.msra.mxu0 %v312
    %333 = vmatprep.subr.bf16.mxu0 0
    %334 = vmatpush1.bf16.msra.mxu0 %v313
    %335 = vmatprep.subr.bf16.mxu0 0
    %336 = vmatpush1.bf16.msra.mxu0 %v314
    %337 = vmatprep.subr.bf16.mxu0 0
    %338 = vmatpush1.bf16.msra.mxu0 %v315
    %339 = vmatprep.subr.bf16.mxu0 0
    %340 = vmatpush1.bf16.msra.mxu0 %v316
    %341 = vmatprep.subr.bf16.mxu0 0
    %342 = vmatpush1.bf16.msra.mxu0 0
    %343 = vmatprep.subr.bf16.mxu0 0
    %344 = vmatpush1.bf16.msra.mxu0 0
    %345 = vmatprep.subr.bf16.mxu0 0
    %346 = vmatpush1.bf16.msra.mxu0 0
    %347 = vmatprep.subr.bf16.mxu0 0
    %348 = vmatpush1.bf16.msra.mxu0 0
    %349 = vmatprep.subr.bf16.mxu0 0
    %350 = vmatpush1.bf16.msra.mxu0 0
    %351 = vmatprep.subr.bf16.mxu0 0
    %352 = vmatpush1.bf16.msra.mxu0 0
    %353 = vmatprep.subr.bf16.mxu0 0
    %354 = vmatpush1.bf16.msra.mxu0 0
    %355 = vmatprep.subr.bf16.mxu0 0
    %356 = vmatpush1.bf16.msra.mxu0 0
    %357 = vmatprep.mubr.bf16.mxu0 0
    %358 = vmatmul.mubr.bf16.gmra.mrb[0].mxu0 %v269
    %v359 = vpop.f32.mrb[0].mxu0
    %v360 = vadd.f32 0.0, %v359
    %v361 = vpop.f32.mrb[0].mxu0
    %v362 = vpop.f32.mrb[0].mxu0
    %v363 = vadd.f32 0.0, %v362
    %v364 = vpop.f32.mrb[0].mxu0
    %365 = vmatprep.mubr.bf16.mxu0 0
    %366 = vmatmul.mubr.bf16.gmra.mrb[0].mxu0 %v270
    %v367 = vpop.f32.mrb[0].mxu0
    %v368 = vadd.f32 0.0, %v367
    %v369 = vpop.f32.mrb[0].mxu0
    %v370 = vpop.f32.mrb[0].mxu0
    %v371 = vadd.f32 0.0, %v370
    %v372 = vpop.f32.mrb[0].mxu0
    %373 = vmatprep.mubr.bf16.mxu0 0
    %374 = vmatmul.mubr.bf16.gmra.mrb[0].mxu0 %v271
    %v375 = vpop.f32.mrb[0].mxu0
    %v376 = vadd.f32 0.0, %v375
    %v377 = vpop.f32.mrb[0].mxu0
    %v378 = vpop.f32.mrb[0].mxu0
    %v379 = vadd.f32 0.0, %v378
    %v380 = vpop.f32.mrb[0].mxu0
    %381 = vmatprep.mubr.bf16.mxu0 0
    %382 = vmatmul.mubr.bf16.gmra.mrb[0].mxu0 %v272
    %v383 = vpop.f32.mrb[0].mxu0
    %v384 = vadd.f32 0.0, %v383
    %v385 = vpop.f32.mrb[0].mxu0
    %v386 = vpop.f32.mrb[0].mxu0
    %v387 = vadd.f32 0.0, %v386
    %v388 = vpop.f32.mrb[0].mxu0
    %389 = vmatprep.mubr.bf16.mxu0 0
    %390 = vmatmul.mubr.bf16.gmra.mrb[0].mxu0 %v273
    %v391 = vpop.f32.mrb[0].mxu0
    %v392 = vadd.f32 0.0, %v391
    %v393 = vpop.f32.mrb[0].mxu0
    %v394 = vpop.f32.mrb[0].mxu0
    %v395 = vadd.f32 0.0, %v394
    %v396 = vpop.f32.mrb[0].mxu0
    %397 = vmatprep.mubr.bf16.mxu0 0
    %398 = vmatmul.mubr.bf16.gmra.mrb[0].mxu0 %v274
    %v399 = vpop.f32.mrb[0].mxu0
    %v400 = vadd.f32 0.0, %v399
    %v401 = vpop.f32.mrb[0].mxu0
    %v402 = vpop.f32.mrb[0].mxu0
    %v403 = vadd.f32 0.0, %v402
    %v404 = vpop.f32.mrb[0].mxu0
    %405 = vmatprep.mubr.bf16.mxu0 0
    %406 = vmatmul.mubr.bf16.gmra.mrb[0].mxu0 %v275
    %v407 = vpop.f32.mrb[0].mxu0
    %v408 = vadd.f32 0.0, %v407
    %v409 = vpop.f32.mrb[0].mxu0
    %v410 = vpop.f32.mrb[0].mxu0
    %v411 = vadd.f32 0.0, %v410
    %v412 = vpop.f32.mrb[0].mxu0
    %413 = vmatprep.mubr.bf16.mxu0 0
    %414 = vmatmul.mubr.bf16.gmra.mrb[0].mxu0 %v276
    %v415 = vpop.f32.mrb[0].mxu0
    %v416 = vadd.f32 0.0, %v415
    %v417 = vpop.f32.mrb[0].mxu0
    %v418 = vpop.f32.mrb[0].mxu0
    %v419 = vadd.f32 0.0, %v418
    %v420 = vpop.f32.mrb[0].mxu0
    %421 = vdwg.mxu0
    %v422 = vpack.c.bf16 %v363, %v360
    %v423 = vpack.c.bf16 %v371, %v368
    %v424 = vpack.c.bf16 %v379, %v376
    %v425 = vpack.c.bf16 %v387, %v384
    %v426 = vpack.c.bf16 %v395, %v392
    %v427 = vpack.c.bf16 %v403, %v400
    %v428 = vpack.c.bf16 %v411, %v408
    %v429 = vpack.c.bf16 %v419, %v416
    %v446 = vunpack.c.l.b16 %v125
    %v447 = vunpack.c.l.b16 %v126
    %v448 = vunpack.c.l.b16 %v127
    %v449 = vunpack.c.l.b16 %v128
    %v450 = vunpack.c.l.b16 %v129
    %v451 = vunpack.c.l.b16 %v130
    %v452 = vunpack.c.l.b16 %v131
    %v453 = vunpack.c.l.b16 %v132
    %v454 = vunpack.c.l.b16 %v133
    %v455 = vunpack.c.l.b16 %v134
    %v456 = vunpack.c.l.b16 %v135
    %v457 = vunpack.c.l.b16 %v136
    %v458 = vunpack.c.l.b16 %v137
    %v459 = vunpack.c.l.b16 %v138
    %v460 = vunpack.c.l.b16 %v139
    %v461 = vunpack.c.l.b16 %v140
    %v462 = vpack.c.b16 %v447, %v446
    %v463 = vpack.c.b16 %v449, %v448
    %v464 = vpack.c.b16 %v451, %v450
    %v465 = vpack.c.b16 %v453, %v452
    %v466 = vpack.c.b16 %v455, %v454
    %v467 = vpack.c.b16 %v457, %v456
    %v468 = vpack.c.b16 %v459, %v458
    %v469 = vpack.c.b16 %v461, %v460
    %478 = vmatprep.subr.bf16.mxu0 0
    %479 = vmatpush1.bf16.msra.mxu0 %v422
    %480 = vmatprep.subr.bf16.mxu0 0
    %481 = vmatpush1.bf16.msra.mxu0 %v423
    %482 = vmatprep.subr.bf16.mxu0 0
    %483 = vmatpush1.bf16.msra.mxu0 %v424
    %484 = vmatprep.subr.bf16.mxu0 0
    %485 = vmatpush1.bf16.msra.mxu0 %v425
    %486 = vmatprep.subr.bf16.mxu0 0
    %487 = vmatpush1.bf16.msra.mxu0 %v426
    %488 = vmatprep.subr.bf16.mxu0 0
    %489 = vmatpush1.bf16.msra.mxu0 %v427
    %490 = vmatprep.subr.bf16.mxu0 0
    %491 = vmatpush1.bf16.msra.mxu0 %v428
    %492 = vmatprep.subr.bf16.mxu0 0
    %493 = vmatpush1.bf16.msra.mxu0 %v429
    %494 = vmatprep.subr.bf16.mxu0 0
    %495 = vmatpush1.bf16.msra.mxu0 0
    %496 = vmatprep.subr.bf16.mxu0 0
    %497 = vmatpush1.bf16.msra.mxu0 0
    %498 = vmatprep.subr.bf16.mxu0 0
    %499 = vmatpush1.bf16.msra.mxu0 0
    %500 = vmatprep.subr.bf16.mxu0 0
    %501 = vmatpush1.bf16.msra.mxu0 0
    %502 = vmatprep.subr.bf16.mxu0 0
    %503 = vmatpush1.bf16.msra.mxu0 0
    %504 = vmatprep.subr.bf16.mxu0 0
    %505 = vmatpush1.bf16.msra.mxu0 0
    %506 = vmatprep.subr.bf16.mxu0 0
    %507 = vmatpush1.bf16.msra.mxu0 0
    %508 = vmatprep.subr.bf16.mxu0 0
    %509 = vmatpush1.bf16.msra.mxu0 0
    %510 = vmatprep.mubr.bf16.mxu0 0
    %511 = vmatmul.mubr.bf16.gmra.mrb[0].mxu0 %v462
    %v512 = vpop.f32.mrb[0].mxu0
    %v513 = vadd.f32 0.0, %v512
    %v514 = vpop.f32.mrb[0].mxu0
    %v515 = vpop.f32.mrb[0].mxu0
    %v516 = vadd.f32 0.0, %v515
    %v517 = vpop.f32.mrb[0].mxu0
    %518 = vmatprep.mubr.bf16.mxu0 0
    %519 = vmatmul.mubr.bf16.gmra.mrb[0].mxu0 %v463
    %v520 = vpop.f32.mrb[0].mxu0
    %v521 = vadd.f32 0.0, %v520
    %v522 = vpop.f32.mrb[0].mxu0
    %v523 = vpop.f32.mrb[0].mxu0
    %v524 = vadd.f32 0.0, %v523
    %v525 = vpop.f32.mrb[0].mxu0
    %526 = vmatprep.mubr.bf16.mxu0 0
    %527 = vmatmul.mubr.bf16.gmra.mrb[0].mxu0 %v464
    %v528 = vpop.f32.mrb[0].mxu0
    %v529 = vadd.f32 0.0, %v528
    %v530 = vpop.f32.mrb[0].mxu0
    %v531 = vpop.f32.mrb[0].mxu0
    %v532 = vadd.f32 0.0, %v531
    %v533 = vpop.f32.mrb[0].mxu0
    %534 = vmatprep.mubr.bf16.mxu0 0
    %535 = vmatmul.mubr.bf16.gmra.mrb[0].mxu0 %v465
    %v536 = vpop.f32.mrb[0].mxu0
    %v537 = vadd.f32 0.0, %v536
    %v538 = vpop.f32.mrb[0].mxu0
    %v539 = vpop.f32.mrb[0].mxu0
    %v540 = vadd.f32 0.0, %v539
    %v541 = vpop.f32.mrb[0].mxu0
    %542 = vmatprep.mubr.bf16.mxu0 0
    %543 = vmatmul.mubr.bf16.gmra.mrb[0].mxu0 %v466
    %v544 = vpop.f32.mrb[0].mxu0
    %v545 = vadd.f32 0.0, %v544
    %v546 = vpop.f32.mrb[0].mxu0
    %v547 = vpop.f32.mrb[0].mxu0
    %v548 = vadd.f32 0.0, %v547
    %v549 = vpop.f32.mrb[0].mxu0
    %550 = vmatprep.mubr.bf16.mxu0 0
    %551 = vmatmul.mubr.bf16.gmra.mrb[0].mxu0 %v467
    %v552 = vpop.f32.mrb[0].mxu0
    %v553 = vadd.f32 0.0, %v552
    %v554 = vpop.f32.mrb[0].mxu0
    %v555 = vpop.f32.mrb[0].mxu0
    %v556 = vadd.f32 0.0, %v555
    %v557 = vpop.f32.mrb[0].mxu0
    %558 = vmatprep.mubr.bf16.mxu0 0
    %559 = vmatmul.mubr.bf16.gmra.mrb[0].mxu0 %v468
    %v560 = vpop.f32.mrb[0].mxu0
    %v561 = vadd.f32 0.0, %v560
    %v562 = vpop.f32.mrb[0].mxu0
    %v563 = vpop.f32.mrb[0].mxu0
    %v564 = vadd.f32 0.0, %v563
    %v565 = vpop.f32.mrb[0].mxu0
    %566 = vmatprep.mubr.bf16.mxu0 0
    %567 = vmatmul.mubr.bf16.gmra.mrb[0].mxu0 %v469
    %v568 = vpop.f32.mrb[0].mxu0
    %v569 = vadd.f32 0.0, %v568
    %v570 = vpop.f32.mrb[0].mxu0
    %v571 = vpop.f32.mrb[0].mxu0
    %v572 = vadd.f32 0.0, %v571
    %v573 = vpop.f32.mrb[0].mxu0
    %574 = vdwg.mxu0
    %v575 = vmax.f32 %v513, 0.0
    %v576 = vmax.f32 %v516, 0.0
    %v577 = vmax.f32 %v521, 0.0
    %v578 = vmax.f32 %v524, 0.0
    %v579 = vmax.f32 %v529, 0.0
    %v580 = vmax.f32 %v532, 0.0
    %v581 = vmax.f32 %v537, 0.0
    %v582 = vmax.f32 %v540, 0.0
    %v583 = vmax.f32 %v545, 0.0
    %v584 = vmax.f32 %v548, 0.0
    %v585 = vmax.f32 %v553, 0.0
    %v586 = vmax.f32 %v556, 0.0
    %v587 = vmax.f32 %v561, 0.0
    %v588 = vmax.f32 %v564, 0.0
    %v589 = vmax.f32 %v569, 0.0
    %v590 = vmax.f32 %v572, 0.0
    %v591 = vadd.f32 %v575, %v576
    %v592 = vadd.f32 %v591, %v577
    %v593 = vadd.f32 %v592, %v578
    %v594 = vadd.f32 %v593, %v579
    %v595 = vadd.f32 %v594, %v580
    %v596 = vadd.f32 %v595, %v581
    %v597 = vadd.f32 %v596, %v582
    %v598 = vadd.f32 %v597, %v583
    %v599 = vadd.f32 %v598, %v584
    %v600 = vadd.f32 %v599, %v585
    %v601 = vadd.f32 %v600, %v586
    %v602 = vadd.f32 %v601, %v587
    %v603 = vadd.f32 %v602, %v588
    %v604 = vadd.f32 %v603, %v589
    %v605 = vadd.f32 %v604, %v590
    %v606 = vrot.slane %v605, 4
    %v607 = vadd.f32 %v605, %v606
    %v608 = vrot.slane %v607, 2
    %v609 = vadd.f32 %v607, %v608
    %v610 = vrot.slane %v609, 1
    %v611 = vadd.f32 %v609, %v610
    %v612 = vmul.f32 %v575, %v575
    %v613 = vmul.f32 %v576, %v576
    %v614 = vmul.f32 %v577, %v577
    %v615 = vmul.f32 %v578, %v578
    %v616 = vmul.f32 %v579, %v579
    %v617 = vmul.f32 %v580, %v580
    %v618 = vmul.f32 %v581, %v581
    %v619 = vmul.f32 %v582, %v582
    %v620 = vmul.f32 %v583, %v583
    %v621 = vmul.f32 %v584, %v584
    %v622 = vmul.f32 %v585, %v585
    %v623 = vmul.f32 %v586, %v586
    %v624 = vmul.f32 %v587, %v587
    %v625 = vmul.f32 %v588, %v588
    %v626 = vmul.f32 %v589, %v589
    %v627 = vmul.f32 %v590, %v590
    %v628 = vadd.f32 %v612, %v613
    %v629 = vadd.f32 %v628, %v614
    %v630 = vadd.f32 %v629, %v615
    %v631 = vadd.f32 %v630, %v616
    %v632 = vadd.f32 %v631, %v617
    %v633 = vadd.f32 %v632, %v618
    %v634 = vadd.f32 %v633, %v619
    %v635 = vadd.f32 %v634, %v620
    %v636 = vadd.f32 %v635, %v621
    %v637 = vadd.f32 %v636, %v622
    %v638 = vadd.f32 %v637, %v623
    %v639 = vadd.f32 %v638, %v624
    %v640 = vadd.f32 %v639, %v625
    %v641 = vadd.f32 %v640, %v626
    %v642 = vadd.f32 %v641, %v627
    %v643 = vrot.slane %v642, 4
    %v644 = vadd.f32 %v642, %v643
    %v645 = vrot.slane %v644, 2
    %v646 = vadd.f32 %v644, %v645
    %v647 = vrot.slane %v646, 1
    %v648 = vadd.f32 %v646, %v647
    %v649 = vmul.f32 %v611, 0.015625
    %v650 = vmul.f32 %v648, 0.015625
    %v651 = vmul.f32 %v649, %v649
    %v652 = vsub.f32 %v650, %v651
    %v653 = vadd.f32 %v652, 1e-05
    %v654 = vrsqrt.pop %v653
    %v655 = vsub.f32 %v575, %v649
    %v656 = vsub.f32 %v576, %v649
    %v657 = vsub.f32 %v577, %v649
    %v658 = vsub.f32 %v578, %v649
    %v659 = vsub.f32 %v579, %v649
    %v660 = vsub.f32 %v580, %v649
    %v661 = vsub.f32 %v581, %v649
    %v662 = vsub.f32 %v582, %v649
    %v663 = vsub.f32 %v583, %v649
    %v664 = vsub.f32 %v584, %v649
    %v665 = vsub.f32 %v585, %v649
    %v666 = vsub.f32 %v586, %v649
    %v667 = vsub.f32 %v587, %v649
    %v668 = vsub.f32 %v588, %v649
    %v669 = vsub.f32 %v589, %v649
    %v670 = vsub.f32 %v590, %v649
    %v671 = vmul.f32 %v655, %v654
    %v672 = vmul.f32 %v656, %v654
    %v673 = vmul.f32 %v657, %v654
    %v674 = vmul.f32 %v658, %v654
    %v675 = vmul.f32 %v659, %v654
    %v676 = vmul.f32 %v660, %v654
    %v677 = vmul.f32 %v661, %v654
    %v678 = vmul.f32 %v662, %v654
    %v679 = vmul.f32 %v663, %v654
    %v680 = vmul.f32 %v664, %v654
    %v681 = vmul.f32 %v665, %v654
    %v682 = vmul.f32 %v666, %v654
    %v683 = vmul.f32 %v667, %v654
    %v684 = vmul.f32 %v668, %v654
    %v685 = vmul.f32 %v669, %v654
    %v686 = vmul.f32 %v670, %v654
    %v687 = vld [vmem:[#allocation8] sm:$0xf]
    %v688 = vld [vmem:[#allocation8 + $0x4] sm:$0xf]
    %v689 = vld [vmem:[#allocation8 + $0x8] sm:$0xf]
    %v690 = vld [vmem:[#allocation8 + $0xc] sm:$0xf]
    %v691 = vld [vmem:[#allocation8 + $0x10] sm:$0xf]
    %v692 = vld [vmem:[#allocation8 + $0x14] sm:$0xf]
    %v693 = vld [vmem:[#allocation8 + $0x18] sm:$0xf]
    %v694 = vld [vmem:[#allocation8 + $0x1c] sm:$0xf]
    %v695 = vld [vmem:[#allocation8 + $0x20] sm:$0xf]
    %v696 = vld [vmem:[#allocation8 + $0x24] sm:$0xf]
    %v697 = vld [vmem:[#allocation8 + $0x28] sm:$0xf]
    %v698 = vld [vmem:[#allocation8 + $0x2c] sm:$0xf]
    %v699 = vld [vmem:[#allocation8 + $0x30] sm:$0xf]
    %v700 = vld [vmem:[#allocation8 + $0x34] sm:$0xf]
    %v701 = vld [vmem:[#allocation8 + $0x38] sm:$0xf]
    %v702 = vld [vmem:[#allocation8 + $0x3c] sm:$0xf]
    %v703 = vpack.c.bf16 %v672, %v671
    %v704 = vpack.c.bf16 %v674, %v673
    %v705 = vpack.c.bf16 %v676, %v675
    %v706 = vpack.c.bf16 %v678, %v677
    %v707 = vpack.c.bf16 %v680, %v679
    %v708 = vpack.c.bf16 %v682, %v681
    %v709 = vpack.c.bf16 %v684, %v683
    %v710 = vpack.c.bf16 %v686, %v685
    %v727 = vunpack.c.l.b16 %v687
    %v728 = vunpack.c.l.b16 %v688
    %v729 = vunpack.c.l.b16 %v689
    %v730 = vunpack.c.l.b16 %v690
    %v731 = vunpack.c.l.b16 %v691
    %v732 = vunpack.c.l.b16 %v692
    %v733 = vunpack.c.l.b16 %v693
    %v734 = vunpack.c.l.b16 %v694
    %v735 = vunpack.c.l.b16 %v695
    %v736 = vunpack.c.l.b16 %v696
    %v737 = vunpack.c.l.b16 %v697
    %v738 = vunpack.c.l.b16 %v698
    %v739 = vunpack.c.l.b16 %v699
    %v740 = vunpack.c.l.b16 %v700
    %v741 = vunpack.c.l.b16 %v701
    %v742 = vunpack.c.l.b16 %v702
    %v743 = vpack.c.b16 %v728, %v727
    %v744 = vpack.c.b16 %v730, %v729
    %v745 = vpack.c.b16 %v732, %v731
    %v746 = vpack.c.b16 %v734, %v733
    %v747 = vpack.c.b16 %v736, %v735
    %v748 = vpack.c.b16 %v738, %v737
    %v749 = vpack.c.b16 %v740, %v739
    %v750 = vpack.c.b16 %v742, %v741
    %759 = vmatprep.subr.bf16.mxu0 0
    %760 = vmatpush1.bf16.msra.mxu0 %v743
    %761 = vmatprep.subr.bf16.mxu0 0
    %762 = vmatpush1.bf16.msra.mxu0 %v744
    %763 = vmatprep.subr.bf16.mxu0 0
    %764 = vmatpush1.bf16.msra.mxu0 %v745
    %765 = vmatprep.subr.bf16.mxu0 0
    %766 = vmatpush1.bf16.msra.mxu0 %v746
    %767 = vmatprep.subr.bf16.mxu0 0
    %768 = vmatpush1.bf16.msra.mxu0 %v747
    %769 = vmatprep.subr.bf16.mxu0 0
    %770 = vmatpush1.bf16.msra.mxu0 %v748
    %771 = vmatprep.subr.bf16.mxu0 0
    %772 = vmatpush1.bf16.msra.mxu0 %v749
    %773 = vmatprep.subr.bf16.mxu0 0
    %774 = vmatpush1.bf16.msra.mxu0 %v750
    %775 = vmatprep.subr.bf16.mxu0 0
    %776 = vmatpush1.bf16.msra.mxu0 0
    %777 = vmatprep.subr.bf16.mxu0 0
    %778 = vmatpush1.bf16.msra.mxu0 0
    %779 = vmatprep.subr.bf16.mxu0 0
    %780 = vmatpush1.bf16.msra.mxu0 0
    %781 = vmatprep.subr.bf16.mxu0 0
    %782 = vmatpush1.bf16.msra.mxu0 0
    %783 = vmatprep.subr.bf16.mxu0 0
    %784 = vmatpush1.bf16.msra.mxu0 0
    %785 = vmatprep.subr.bf16.mxu0 0
    %786 = vmatpush1.bf16.msra.mxu0 0
    %787 = vmatprep.subr.bf16.mxu0 0
    %788 = vmatpush1.bf16.msra.mxu0 0
    %789 = vmatprep.subr.bf16.mxu0 0
    %790 = vmatpush1.bf16.msra.mxu0 0
    %791 = vmatprep.mubr.bf16.mxu0 0
    %792 = vmatmul.mubr.bf16.gmra.mrb[0].mxu0 %v703
    %v793 = vpop.f32.mrb[0].mxu0
    %v794 = vadd.f32 0.0, %v793
    %v795 = vpop.f32.mrb[0].mxu0
    %v796 = vpop.f32.mrb[0].mxu0
    %v797 = vadd.f32 0.0, %v796
    %v798 = vpop.f32.mrb[0].mxu0
    %799 = vmatprep.mubr.bf16.mxu0 0
    %800 = vmatmul.mubr.bf16.gmra.mrb[0].mxu0 %v704
    %v801 = vpop.f32.mrb[0].mxu0
    %v802 = vadd.f32 0.0, %v801
    %v803 = vpop.f32.mrb[0].mxu0
    %v804 = vpop.f32.mrb[0].mxu0
    %v805 = vadd.f32 0.0, %v804
    %v806 = vpop.f32.mrb[0].mxu0
    %807 = vmatprep.mubr.bf16.mxu0 0
    %808 = vmatmul.mubr.bf16.gmra.mrb[0].mxu0 %v705
    %v809 = vpop.f32.mrb[0].mxu0
    %v810 = vadd.f32 0.0, %v809
    %v811 = vpop.f32.mrb[0].mxu0
    %v812 = vpop.f32.mrb[0].mxu0
    %v813 = vadd.f32 0.0, %v812
    %v814 = vpop.f32.mrb[0].mxu0
    %815 = vmatprep.mubr.bf16.mxu0 0
    %816 = vmatmul.mubr.bf16.gmra.mrb[0].mxu0 %v706
    %v817 = vpop.f32.mrb[0].mxu0
    %v818 = vadd.f32 0.0, %v817
    %v819 = vpop.f32.mrb[0].mxu0
    %v820 = vpop.f32.mrb[0].mxu0
    %v821 = vadd.f32 0.0, %v820
    %v822 = vpop.f32.mrb[0].mxu0
    %823 = vmatprep.mubr.bf16.mxu0 0
    %824 = vmatmul.mubr.bf16.gmra.mrb[0].mxu0 %v707
    %v825 = vpop.f32.mrb[0].mxu0
    %v826 = vadd.f32 0.0, %v825
    %v827 = vpop.f32.mrb[0].mxu0
    %v828 = vpop.f32.mrb[0].mxu0
    %v829 = vadd.f32 0.0, %v828
    %v830 = vpop.f32.mrb[0].mxu0
    %831 = vmatprep.mubr.bf16.mxu0 0
    %832 = vmatmul.mubr.bf16.gmra.mrb[0].mxu0 %v708
    %v833 = vpop.f32.mrb[0].mxu0
    %v834 = vadd.f32 0.0, %v833
    %v835 = vpop.f32.mrb[0].mxu0
    %v836 = vpop.f32.mrb[0].mxu0
    %v837 = vadd.f32 0.0, %v836
    %v838 = vpop.f32.mrb[0].mxu0
    %839 = vmatprep.mubr.bf16.mxu0 0
    %840 = vmatmul.mubr.bf16.gmra.mrb[0].mxu0 %v709
    %v841 = vpop.f32.mrb[0].mxu0
    %v842 = vadd.f32 0.0, %v841
    %v843 = vpop.f32.mrb[0].mxu0
    %v844 = vpop.f32.mrb[0].mxu0
    %v845 = vadd.f32 0.0, %v844
    %v846 = vpop.f32.mrb[0].mxu0
    %847 = vmatprep.mubr.bf16.mxu0 0
    %848 = vmatmul.mubr.bf16.gmra.mrb[0].mxu0 %v710
    %v849 = vpop.f32.mrb[0].mxu0
    %v850 = vadd.f32 0.0, %v849
    %v851 = vpop.f32.mrb[0].mxu0
    %v852 = vpop.f32.mrb[0].mxu0
    %v853 = vadd.f32 0.0, %v852
    %v854 = vpop.f32.mrb[0].mxu0
    %855 = vdwg.mxu0
    %v856 = vpack.c.bf16 %v797, %v794
    %v857 = vpack.c.bf16 %v805, %v802
    %v858 = vpack.c.bf16 %v813, %v810
    %v859 = vpack.c.bf16 %v821, %v818
    %v860 = vpack.c.bf16 %v829, %v826
    %v861 = vpack.c.bf16 %v837, %v834
    %v862 = vpack.c.bf16 %v845, %v842
    %v863 = vpack.c.bf16 %v853, %v850
    %864 = vmatprep.subr.bf16.mxu0 0
    %865 = vmatpush1.bf16.msra.mxu0 %v856
    %866 = vmatprep.subr.bf16.mxu0 0
    %867 = vmatpush1.bf16.msra.mxu0 %v857
    %868 = vmatprep.subr.bf16.mxu0 0
    %869 = vmatpush1.bf16.msra.mxu0 %v858
    %870 = vmatprep.subr.bf16.mxu0 0
    %871 = vmatpush1.bf16.msra.mxu0 %v859
    %872 = vmatprep.subr.bf16.mxu0 0
    %873 = vmatpush1.bf16.msra.mxu0 %v860
    %874 = vmatprep.subr.bf16.mxu0 0
    %875 = vmatpush1.bf16.msra.mxu0 %v861
    %876 = vmatprep.subr.bf16.mxu0 0
    %877 = vmatpush1.bf16.msra.mxu0 %v862
    %878 = vmatprep.subr.bf16.mxu0 0
    %879 = vmatpush1.bf16.msra.mxu0 %v863
    %880 = vmatprep.subr.bf16.mxu0 0
    %881 = vmatpush1.bf16.msra.mxu0 0
    %882 = vmatprep.subr.bf16.mxu0 0
    %883 = vmatpush1.bf16.msra.mxu0 0
    %884 = vmatprep.subr.bf16.mxu0 0
    %885 = vmatpush1.bf16.msra.mxu0 0
    %886 = vmatprep.subr.bf16.mxu0 0
    %887 = vmatpush1.bf16.msra.mxu0 0
    %888 = vmatprep.subr.bf16.mxu0 0
    %889 = vmatpush1.bf16.msra.mxu0 0
    %890 = vmatprep.subr.bf16.mxu0 0
    %891 = vmatpush1.bf16.msra.mxu0 0
    %892 = vmatprep.subr.bf16.mxu0 0
    %893 = vmatpush1.bf16.msra.mxu0 0
    %894 = vmatprep.subr.bf16.mxu0 0
    %895 = vmatpush1.bf16.msra.mxu0 0
    %896 = vmatprep.mubr.bf16.mxu0 0
    %897 = vmatmul.mubr.bf16.gmra.mrb[0].mxu0 %v462
    %v898 = vpop.f32.mrb[0].mxu0
    %v899 = vadd.f32 0.0, %v898
    %v900 = vpop.f32.mrb[0].mxu0
    %v901 = vpop.f32.mrb[0].mxu0
    %v902 = vadd.f32 0.0, %v901
    %v903 = vpop.f32.mrb[0].mxu0
    %904 = vmatprep.mubr.bf16.mxu0 0
    %905 = vmatmul.mubr.bf16.gmra.mrb[0].mxu0 %v463
    %v906 = vpop.f32.mrb[0].mxu0
    %v907 = vadd.f32 0.0, %v906
    %v908 = vpop.f32.mrb[0].mxu0
    %v909 = vpop.f32.mrb[0].mxu0
    %v910 = vadd.f32 0.0, %v909
    %v911 = vpop.f32.mrb[0].mxu0
    %912 = vmatprep.mubr.bf16.mxu0 0
    %913 = vmatmul.mubr.bf16.gmra.mrb[0].mxu0 %v464
    %v914 = vpop.f32.mrb[0].mxu0
    %v915 = vadd.f32 0.0, %v914
    %v916 = vpop.f32.mrb[0].mxu0
    %v917 = vpop.f32.mrb[0].mxu0
    %v918 = vadd.f32 0.0, %v917
    %v919 = vpop.f32.mrb[0].mxu0
    %920 = vmatprep.mubr.bf16.mxu0 0
    %921 = vmatmul.mubr.bf16.gmra.mrb[0].mxu0 %v465
    %v922 = vpop.f32.mrb[0].mxu0
    %v923 = vadd.f32 0.0, %v922
    %v924 = vpop.f32.mrb[0].mxu0
    %v925 = vpop.f32.mrb[0].mxu0
    %v926 = vadd.f32 0.0, %v925
    %v927 = vpop.f32.mrb[0].mxu0
    %928 = vmatprep.mubr.bf16.mxu0 0
    %929 = vmatmul.mubr.bf16.gmra.mrb[0].mxu0 %v466
    %v930 = vpop.f32.mrb[0].mxu0
    %v931 = vadd.f32 0.0, %v930
    %v932 = vpop.f32.mrb[0].mxu0
    %v933 = vpop.f32.mrb[0].mxu0
    %v934 = vadd.f32 0.0, %v933
    %v935 = vpop.f32.mrb[0].mxu0
    %936 = vmatprep.mubr.bf16.mxu0 0
    %937 = vmatmul.mubr.bf16.gmra.mrb[0].mxu0 %v467
    %v938 = vpop.f32.mrb[0].mxu0
    %v939 = vadd.f32 0.0, %v938
    %v940 = vpop.f32.mrb[0].mxu0
    %v941 = vpop.f32.mrb[0].mxu0
    %v942 = vadd.f32 0.0, %v941
    %v943 = vpop.f32.mrb[0].mxu0
    %944 = vmatprep.mubr.bf16.mxu0 0
    %945 = vmatmul.mubr.bf16.gmra.mrb[0].mxu0 %v468
    %v946 = vpop.f32.mrb[0].mxu0
    %v947 = vadd.f32 0.0, %v946
    %v948 = vpop.f32.mrb[0].mxu0
    %v949 = vpop.f32.mrb[0].mxu0
    %v950 = vadd.f32 0.0, %v949
    %v951 = vpop.f32.mrb[0].mxu0
    %952 = vmatprep.mubr.bf16.mxu0 0
    %953 = vmatmul.mubr.bf16.gmra.mrb[0].mxu0 %v469
    %v954 = vpop.f32.mrb[0].mxu0
    %v955 = vadd.f32 0.0, %v954
    %v956 = vpop.f32.mrb[0].mxu0
    %v957 = vpop.f32.mrb[0].mxu0
    %v958 = vadd.f32 0.0, %v957
    %v959 = vpop.f32.mrb[0].mxu0
    %960 = vdwg.mxu0
    %v961 = vmax.f32 %v899, 0.0
    %v962 = vmax.f32 %v902, 0.0
    %v963 = vmax.f32 %v907, 0.0
    %v964 = vmax.f32 %v910, 0.0
    %v965 = vmax.f32 %v915, 0.0
    %v966 = vmax.f32 %v918, 0.0
    %v967 = vmax.f32 %v923, 0.0
    %v968 = vmax.f32 %v926, 0.0
    %v969 = vmax.f32 %v931, 0.0
    %v970 = vmax.f32 %v934, 0.0
    %v971 = vmax.f32 %v939, 0.0
    %v972 = vmax.f32 %v942, 0.0
    %v973 = vmax.f32 %v947, 0.0
    %v974 = vmax.f32 %v950, 0.0
    %v975 = vmax.f32 %v955, 0.0
    %v976 = vmax.f32 %v958, 0.0
    %v977 = vadd.f32 %v961, %v962
    %v978 = vadd.f32 %v977, %v963
    %v979 = vadd.f32 %v978, %v964
    %v980 = vadd.f32 %v979, %v965
    %v981 = vadd.f32 %v980, %v966
    %v982 = vadd.f32 %v981, %v967
    %v983 = vadd.f32 %v982, %v968
    %v984 = vadd.f32 %v983, %v969
    %v985 = vadd.f32 %v984, %v970
    %v986 = vadd.f32 %v985, %v971
    %v987 = vadd.f32 %v986, %v972
    %v988 = vadd.f32 %v987, %v973
    %v989 = vadd.f32 %v988, %v974
    %v990 = vadd.f32 %v989, %v975
    %v991 = vadd.f32 %v990, %v976
    %v992 = vrot.slane %v991, 4
    %v993 = vadd.f32 %v991, %v992
    %v994 = vrot.slane %v993, 2
    %v995 = vadd.f32 %v993, %v994
    %v996 = vrot.slane %v995, 1
    %v997 = vadd.f32 %v995, %v996
    %v998 = vmul.f32 %v961, %v961
    %v999 = vmul.f32 %v962, %v962
    %v1000 = vmul.f32 %v963, %v963
    %v1001 = vmul.f32 %v964, %v964
    %v1002 = vmul.f32 %v965, %v965
    %v1003 = vmul.f32 %v966, %v966
    %v1004 = vmul.f32 %v967, %v967
    %v1005 = vmul.f32 %v968, %v968
    %v1006 = vmul.f32 %v969, %v969
    %v1007 = vmul.f32 %v970, %v970
    %v1008 = vmul.f32 %v971, %v971
    %v1009 = vmul.f32 %v972, %v972
    %v1010 = vmul.f32 %v973, %v973
    %v1011 = vmul.f32 %v974, %v974
    %v1012 = vmul.f32 %v975, %v975
    %v1013 = vmul.f32 %v976, %v976
    %v1014 = vadd.f32 %v998, %v999
    %v1015 = vadd.f32 %v1014, %v1000
    %v1016 = vadd.f32 %v1015, %v1001
    %v1017 = vadd.f32 %v1016, %v1002
    %v1018 = vadd.f32 %v1017, %v1003
    %v1019 = vadd.f32 %v1018, %v1004
    %v1020 = vadd.f32 %v1019, %v1005
    %v1021 = vadd.f32 %v1020, %v1006
    %v1022 = vadd.f32 %v1021, %v1007
    %v1023 = vadd.f32 %v1022, %v1008
    %v1024 = vadd.f32 %v1023, %v1009
    %v1025 = vadd.f32 %v1024, %v1010
    %v1026 = vadd.f32 %v1025, %v1011
    %v1027 = vadd.f32 %v1026, %v1012
    %v1028 = vadd.f32 %v1027, %v1013
    %v1029 = vrot.slane %v1028, 4
    %v1030 = vadd.f32 %v1028, %v1029
    %v1031 = vrot.slane %v1030, 2
    %v1032 = vadd.f32 %v1030, %v1031
    %v1033 = vrot.slane %v1032, 1
    %v1034 = vadd.f32 %v1032, %v1033
    %v1035 = vmul.f32 %v997, 0.015625
    %v1036 = vmul.f32 %v1034, 0.015625
    %v1037 = vmul.f32 %v1035, %v1035
    %v1038 = vsub.f32 %v1036, %v1037
    %v1039 = vadd.f32 %v1038, 1e-05
    %v1040 = vrsqrt.pop %v1039
    %v1041 = vsub.f32 %v961, %v1035
    %v1042 = vsub.f32 %v962, %v1035
    %v1043 = vsub.f32 %v963, %v1035
    %v1044 = vsub.f32 %v964, %v1035
    %v1045 = vsub.f32 %v965, %v1035
    %v1046 = vsub.f32 %v966, %v1035
    %v1047 = vsub.f32 %v967, %v1035
    %v1048 = vsub.f32 %v968, %v1035
    %v1049 = vsub.f32 %v969, %v1035
    %v1050 = vsub.f32 %v970, %v1035
    %v1051 = vsub.f32 %v971, %v1035
    %v1052 = vsub.f32 %v972, %v1035
    %v1053 = vsub.f32 %v973, %v1035
    %v1054 = vsub.f32 %v974, %v1035
    %v1055 = vsub.f32 %v975, %v1035
    %v1056 = vsub.f32 %v976, %v1035
    %v1057 = vmul.f32 %v1041, %v1040
    %v1058 = vmul.f32 %v1042, %v1040
    %v1059 = vmul.f32 %v1043, %v1040
    %v1060 = vmul.f32 %v1044, %v1040
    %v1061 = vmul.f32 %v1045, %v1040
    %v1062 = vmul.f32 %v1046, %v1040
    %v1063 = vmul.f32 %v1047, %v1040
    %v1064 = vmul.f32 %v1048, %v1040
    %v1065 = vmul.f32 %v1049, %v1040
    %v1066 = vmul.f32 %v1050, %v1040
    %v1067 = vmul.f32 %v1051, %v1040
    %v1068 = vmul.f32 %v1052, %v1040
    %v1069 = vmul.f32 %v1053, %v1040
    %v1070 = vmul.f32 %v1054, %v1040
    %v1071 = vmul.f32 %v1055, %v1040
    %v1072 = vmul.f32 %v1056, %v1040
    %v1073 = vld [vmem:[#allocation10] sm:$0xf]
    %v1074 = vld [vmem:[#allocation10 + $0x4] sm:$0xf]
    %v1075 = vld [vmem:[#allocation10 + $0x8] sm:$0xf]
    %v1076 = vld [vmem:[#allocation10 + $0xc] sm:$0xf]
    %v1077 = vld [vmem:[#allocation10 + $0x10] sm:$0xf]
    %v1078 = vld [vmem:[#allocation10 + $0x14] sm:$0xf]
    %v1079 = vld [vmem:[#allocation10 + $0x18] sm:$0xf]
    %v1080 = vld [vmem:[#allocation10 + $0x1c] sm:$0xf]
    %v1081 = vld [vmem:[#allocation10 + $0x20] sm:$0xf]
    %v1082 = vld [vmem:[#allocation10 + $0x24] sm:$0xf]
    %v1083 = vld [vmem:[#allocation10 + $0x28] sm:$0xf]
    %v1084 = vld [vmem:[#allocation10 + $0x2c] sm:$0xf]
    %v1085 = vld [vmem:[#allocation10 + $0x30] sm:$0xf]
    %v1086 = vld [vmem:[#allocation10 + $0x34] sm:$0xf]
    %v1087 = vld [vmem:[#allocation10 + $0x38] sm:$0xf]
    %v1088 = vld [vmem:[#allocation10 + $0x3c] sm:$0xf]
    %v1089 = vpack.c.bf16 %v1058, %v1057
    %v1090 = vpack.c.bf16 %v1060, %v1059
    %v1091 = vpack.c.bf16 %v1062, %v1061
    %v1092 = vpack.c.bf16 %v1064, %v1063
    %v1093 = vpack.c.bf16 %v1066, %v1065
    %v1094 = vpack.c.bf16 %v1068, %v1067
    %v1095 = vpack.c.bf16 %v1070, %v1069
    %v1096 = vpack.c.bf16 %v1072, %v1071
    %v1113 = vunpack.c.l.b16 %v1073
    %v1114 = vunpack.c.l.b16 %v1074
    %v1115 = vunpack.c.l.b16 %v1075
    %v1116 = vunpack.c.l.b16 %v1076
    %v1117 = vunpack.c.l.b16 %v1077
    %v1118 = vunpack.c.l.b16 %v1078
    %v1119 = vunpack.c.l.b16 %v1079
    %v1120 = vunpack.c.l.b16 %v1080
    %v1121 = vunpack.c.l.b16 %v1081
    %v1122 = vunpack.c.l.b16 %v1082
    %v1123 = vunpack.c.l.b16 %v1083
    %v1124 = vunpack.c.l.b16 %v1084
    %v1125 = vunpack.c.l.b16 %v1085
    %v1126 = vunpack.c.l.b16 %v1086
    %v1127 = vunpack.c.l.b16 %v1087
    %v1128 = vunpack.c.l.b16 %v1088
    %v1129 = vpack.c.b16 %v1114, %v1113
    %v1130 = vpack.c.b16 %v1116, %v1115
    %v1131 = vpack.c.b16 %v1118, %v1117
    %v1132 = vpack.c.b16 %v1120, %v1119
    %v1133 = vpack.c.b16 %v1122, %v1121
    %v1134 = vpack.c.b16 %v1124, %v1123
    %v1135 = vpack.c.b16 %v1126, %v1125
    %v1136 = vpack.c.b16 %v1128, %v1127
    %1145 = vmatprep.subr.bf16.mxu0 0
    %1146 = vmatpush1.bf16.msra.mxu0 %v1129
    %1147 = vmatprep.subr.bf16.mxu0 0
    %1148 = vmatpush1.bf16.msra.mxu0 %v1130
    %1149 = vmatprep.subr.bf16.mxu0 0
    %1150 = vmatpush1.bf16.msra.mxu0 %v1131
    %1151 = vmatprep.subr.bf16.mxu0 0
    %1152 = vmatpush1.bf16.msra.mxu0 %v1132
    %1153 = vmatprep.subr.bf16.mxu0 0
    %1154 = vmatpush1.bf16.msra.mxu0 %v1133
    %1155 = vmatprep.subr.bf16.mxu0 0
    %1156 = vmatpush1.bf16.msra.mxu0 %v1134
    %1157 = vmatprep.subr.bf16.mxu0 0
    %1158 = vmatpush1.bf16.msra.mxu0 %v1135
    %1159 = vmatprep.subr.bf16.mxu0 0
    %1160 = vmatpush1.bf16.msra.mxu0 %v1136
    %1161 = vmatprep.subr.bf16.mxu0 0
    %1162 = vmatpush1.bf16.msra.mxu0 0
    %1163 = vmatprep.subr.bf16.mxu0 0
    %1164 = vmatpush1.bf16.msra.mxu0 0
    %1165 = vmatprep.subr.bf16.mxu0 0
    %1166 = vmatpush1.bf16.msra.mxu0 0
    %1167 = vmatprep.subr.bf16.mxu0 0
    %1168 = vmatpush1.bf16.msra.mxu0 0
    %1169 = vmatprep.subr.bf16.mxu0 0
    %1170 = vmatpush1.bf16.msra.mxu0 0
    %1171 = vmatprep.subr.bf16.mxu0 0
    %1172 = vmatpush1.bf16.msra.mxu0 0
    %1173 = vmatprep.subr.bf16.mxu0 0
    %1174 = vmatpush1.bf16.msra.mxu0 0
    %1175 = vmatprep.subr.bf16.mxu0 0
    %1176 = vmatpush1.bf16.msra.mxu0 0
    %1177 = vmatprep.mubr.bf16.mxu0 0
    %1178 = vmatmul.mubr.bf16.gmra.mrb[0].mxu0 %v1089
    %v1179 = vpop.f32.mrb[0].mxu0
    %v1180 = vadd.f32 0.0, %v1179
    %v1181 = vpop.f32.mrb[0].mxu0
    %v1182 = vpop.f32.mrb[0].mxu0
    %v1183 = vadd.f32 0.0, %v1182
    %v1184 = vpop.f32.mrb[0].mxu0
    %1185 = vmatprep.mubr.bf16.mxu0 0
    %1186 = vmatmul.mubr.bf16.gmra.mrb[0].mxu0 %v1090
    %v1187 = vpop.f32.mrb[0].mxu0
    %v1188 = vadd.f32 0.0, %v1187
    %v1189 = vpop.f32.mrb[0].mxu0
    %v1190 = vpop.f32.mrb[0].mxu0
    %v1191 = vadd.f32 0.0, %v1190
    %v1192 = vpop.f32.mrb[0].mxu0
    %1193 = vmatprep.mubr.bf16.mxu0 0
    %1194 = vmatmul.mubr.bf16.gmra.mrb[0].mxu0 %v1091
    %v1195 = vpop.f32.mrb[0].mxu0
    %v1196 = vadd.f32 0.0, %v1195
    %v1197 = vpop.f32.mrb[0].mxu0
    %v1198 = vpop.f32.mrb[0].mxu0
    %v1199 = vadd.f32 0.0, %v1198
    %v1200 = vpop.f32.mrb[0].mxu0
    %1201 = vmatprep.mubr.bf16.mxu0 0
    %1202 = vmatmul.mubr.bf16.gmra.mrb[0].mxu0 %v1092
    %v1203 = vpop.f32.mrb[0].mxu0
    %v1204 = vadd.f32 0.0, %v1203
    %v1205 = vpop.f32.mrb[0].mxu0
    %v1206 = vpop.f32.mrb[0].mxu0
    %v1207 = vadd.f32 0.0, %v1206
    %v1208 = vpop.f32.mrb[0].mxu0
    %1209 = vmatprep.mubr.bf16.mxu0 0
    %1210 = vmatmul.mubr.bf16.gmra.mrb[0].mxu0 %v1093
    %v1211 = vpop.f32.mrb[0].mxu0
    %v1212 = vadd.f32 0.0, %v1211
    %v1213 = vpop.f32.mrb[0].mxu0
    %v1214 = vpop.f32.mrb[0].mxu0
    %v1215 = vadd.f32 0.0, %v1214
    %v1216 = vpop.f32.mrb[0].mxu0
    %1217 = vmatprep.mubr.bf16.mxu0 0
    %1218 = vmatmul.mubr.bf16.gmra.mrb[0].mxu0 %v1094
    %v1219 = vpop.f32.mrb[0].mxu0
    %v1220 = vadd.f32 0.0, %v1219
    %v1221 = vpop.f32.mrb[0].mxu0
    %v1222 = vpop.f32.mrb[0].mxu0
    %v1223 = vadd.f32 0.0, %v1222
    %v1224 = vpop.f32.mrb[0].mxu0
    %1225 = vmatprep.mubr.bf16.mxu0 0
    %1226 = vmatmul.mubr.bf16.gmra.mrb[0].mxu0 %v1095
    %v1227 = vpop.f32.mrb[0].mxu0
    %v1228 = vadd.f32 0.0, %v1227
    %v1229 = vpop.f32.mrb[0].mxu0
    %v1230 = vpop.f32.mrb[0].mxu0
    %v1231 = vadd.f32 0.0, %v1230
    %v1232 = vpop.f32.mrb[0].mxu0
    %1233 = vmatprep.mubr.bf16.mxu0 0
    %1234 = vmatmul.mubr.bf16.gmra.mrb[0].mxu0 %v1096
    %v1235 = vpop.f32.mrb[0].mxu0
    %v1236 = vadd.f32 0.0, %v1235
    %v1237 = vpop.f32.mrb[0].mxu0
    %v1238 = vpop.f32.mrb[0].mxu0
    %v1239 = vadd.f32 0.0, %v1238
    %v1240 = vpop.f32.mrb[0].mxu0
    %1241 = vdwg.mxu0
    %v1242 = vpack.c.bf16 %v1183, %v1180
    %v1243 = vpack.c.bf16 %v1191, %v1188
    %v1244 = vpack.c.bf16 %v1199, %v1196
    %v1245 = vpack.c.bf16 %v1207, %v1204
    %v1246 = vpack.c.bf16 %v1215, %v1212
    %v1247 = vpack.c.bf16 %v1223, %v1220
    %v1248 = vpack.c.bf16 %v1231, %v1228
    %v1249 = vpack.c.bf16 %v1239, %v1236
    %1250 = vmatprep.subr.bf16.mxu0 0
    %1251 = vmatpush1.bf16.msra.mxu0 %v1242
    %1252 = vmatprep.subr.bf16.mxu0 0
    %1253 = vmatpush1.bf16.msra.mxu0 %v1243
    %1254 = vmatprep.subr.bf16.mxu0 0
    %1255 = vmatpush1.bf16.msra.mxu0 %v1244
    %1256 = vmatprep.subr.bf16.mxu0 0
    %1257 = vmatpush1.bf16.msra.mxu0 %v1245
    %1258 = vmatprep.subr.bf16.mxu0 0
    %1259 = vmatpush1.bf16.msra.mxu0 %v1246
    %1260 = vmatprep.subr.bf16.mxu0 0
    %1261 = vmatpush1.bf16.msra.mxu0 %v1247
    %1262 = vmatprep.subr.bf16.mxu0 0
    %1263 = vmatpush1.bf16.msra.mxu0 %v1248
    %1264 = vmatprep.subr.bf16.mxu0 0
    %1265 = vmatpush1.bf16.msra.mxu0 %v1249
    %1266 = vmatprep.subr.bf16.mxu0 0
    %1267 = vmatpush1.bf16.msra.mxu0 0
    %1268 = vmatprep.subr.bf16.mxu0 0
    %1269 = vmatpush1.bf16.msra.mxu0 0
    %1270 = vmatprep.subr.bf16.mxu0 0
    %1271 = vmatpush1.bf16.msra.mxu0 0
    %1272 = vmatprep.subr.bf16.mxu0 0
    %1273 = vmatpush1.bf16.msra.mxu0 0
    %1274 = vmatprep.subr.bf16.mxu0 0
    %1275 = vmatpush1.bf16.msra.mxu0 0
    %1276 = vmatprep.subr.bf16.mxu0 0
    %1277 = vmatpush1.bf16.msra.mxu0 0
    %1278 = vmatprep.subr.bf16.mxu0 0
    %1279 = vmatpush1.bf16.msra.mxu0 0
    %1280 = vmatprep.subr.bf16.mxu0 0
    %1281 = vmatpush1.bf16.msra.mxu0 0
    %1282 = vmatprep.mubr.bf16.mxu0 0
    %1283 = vmatmul.mubr.bf16.gmra.mrb[0].mxu0 %v462
    %v1284 = vpop.f32.mrb[0].mxu0
    %v1285 = vadd.f32 0.0, %v1284
    %v1286 = vpop.f32.mrb[0].mxu0
    %v1287 = vpop.f32.mrb[0].mxu0
    %v1288 = vadd.f32 0.0, %v1287
    %v1289 = vpop.f32.mrb[0].mxu0
    %1290 = vmatprep.mubr.bf16.mxu0 0
    %1291 = vmatmul.mubr.bf16.gmra.mrb[0].mxu0 %v463
    %v1292 = vpop.f32.mrb[0].mxu0
    %v1293 = vadd.f32 0.0, %v1292
    %v1294 = vpop.f32.mrb[0].mxu0
    %v1295 = vpop.f32.mrb[0].mxu0
    %v1296 = vadd.f32 0.0, %v1295
    %v1297 = vpop.f32.mrb[0].mxu0
    %1298 = vmatprep.mubr.bf16.mxu0 0
    %1299 = vmatmul.mubr.bf16.gmra.mrb[0].mxu0 %v464
    %v1300 = vpop.f32.mrb[0].mxu0
    %v1301 = vadd.f32 0.0, %v1300
    %v1302 = vpop.f32.mrb[0].mxu0
    %v1303 = vpop.f32.mrb[0].mxu0
    %v1304 = vadd.f32 0.0, %v1303
    %v1305 = vpop.f32.mrb[0].mxu0
    %1306 = vmatprep.mubr.bf16.mxu0 0
    %1307 = vmatmul.mubr.bf16.gmra.mrb[0].mxu0 %v465
    %v1308 = vpop.f32.mrb[0].mxu0
    %v1309 = vadd.f32 0.0, %v1308
    %v1310 = vpop.f32.mrb[0].mxu0
    %v1311 = vpop.f32.mrb[0].mxu0
    %v1312 = vadd.f32 0.0, %v1311
    %v1313 = vpop.f32.mrb[0].mxu0
    %1314 = vmatprep.mubr.bf16.mxu0 0
    %1315 = vmatmul.mubr.bf16.gmra.mrb[0].mxu0 %v466
    %v1316 = vpop.f32.mrb[0].mxu0
    %v1317 = vadd.f32 0.0, %v1316
    %v1318 = vpop.f32.mrb[0].mxu0
    %v1319 = vpop.f32.mrb[0].mxu0
    %v1320 = vadd.f32 0.0, %v1319
    %v1321 = vpop.f32.mrb[0].mxu0
    %1322 = vmatprep.mubr.bf16.mxu0 0
    %1323 = vmatmul.mubr.bf16.gmra.mrb[0].mxu0 %v467
    %v1324 = vpop.f32.mrb[0].mxu0
    %v1325 = vadd.f32 0.0, %v1324
    %v1326 = vpop.f32.mrb[0].mxu0
    %v1327 = vpop.f32.mrb[0].mxu0
    %v1328 = vadd.f32 0.0, %v1327
    %v1329 = vpop.f32.mrb[0].mxu0
    %1330 = vmatprep.mubr.bf16.mxu0 0
    %1331 = vmatmul.mubr.bf16.gmra.mrb[0].mxu0 %v468
    %v1332 = vpop.f32.mrb[0].mxu0
    %v1333 = vadd.f32 0.0, %v1332
    %v1334 = vpop.f32.mrb[0].mxu0
    %v1335 = vpop.f32.mrb[0].mxu0
    %v1336 = vadd.f32 0.0, %v1335
    %v1337 = vpop.f32.mrb[0].mxu0
    %1338 = vmatprep.mubr.bf16.mxu0 0
    %1339 = vmatmul.mubr.bf16.gmra.mrb[0].mxu0 %v469
    %v1340 = vpop.f32.mrb[0].mxu0
    %v1341 = vadd.f32 0.0, %v1340
    %v1342 = vpop.f32.mrb[0].mxu0
    %v1343 = vpop.f32.mrb[0].mxu0
    %v1344 = vadd.f32 0.0, %v1343
    %v1345 = vpop.f32.mrb[0].mxu0
    %1346 = vdwg.mxu0
    %1347 = vst [vmem:[#allocation14] sm:$0xff] %v1285
    %1348 = vst [vmem:[#allocation14 + $0x8] sm:$0xff] %v1288
    %1349 = vst [vmem:[#allocation14 + $0x10] sm:$0xff] %v1293
    %1350 = vst [vmem:[#allocation14 + $0x18] sm:$0xff] %v1296
    %1351 = vst [vmem:[#allocation14 + $0x20] sm:$0xff] %v1301
    %1352 = vst [vmem:[#allocation14 + $0x28] sm:$0xff] %v1304
    %1353 = vst [vmem:[#allocation14 + $0x30] sm:$0xff] %v1309
    %1354 = vst [vmem:[#allocation14 + $0x38] sm:$0xff] %v1312
    %1355 = vst [vmem:[#allocation14 + $0x40] sm:$0xff] %v1317
    %1356 = vst [vmem:[#allocation14 + $0x48] sm:$0xff] %v1320
    %1357 = vst [vmem:[#allocation14 + $0x50] sm:$0xff] %v1325
    %1358 = vst [vmem:[#allocation14 + $0x58] sm:$0xff] %v1328
    %1359 = vst [vmem:[#allocation14 + $0x60] sm:$0xff] %v1333
    %1360 = vst [vmem:[#allocation14 + $0x68] sm:$0xff] %v1336
    %1361 = vst [vmem:[#allocation14 + $0x70] sm:$0xff] %v1341
    %1362 = vst [vmem:[#allocation14 + $0x78] sm:$0xff] %v1344
    %v1363 = vld [vmem:[#allocation11] sm:$0xff]
    %v1364 = vld [vmem:[#allocation11 + $0x8] sm:$0xff]
    %v1365 = vld [vmem:[#allocation11 + $0x10] sm:$0xff]
    %v1366 = vld [vmem:[#allocation11 + $0x18] sm:$0xff]
    %v1367 = vld [vmem:[#allocation11 + $0x20] sm:$0xff]
    %v1368 = vld [vmem:[#allocation11 + $0x28] sm:$0xff]
    %v1369 = vld [vmem:[#allocation11 + $0x30] sm:$0xff]
    %v1370 = vld [vmem:[#allocation11 + $0x38] sm:$0xff]
    %v1371 = vld [vmem:[#allocation11 + $0x40] sm:$0xff]
    %v1372 = vld [vmem:[#allocation11 + $0x48] sm:$0xff]
    %v1373 = vld [vmem:[#allocation11 + $0x50] sm:$0xff]
    %v1374 = vld [vmem:[#allocation11 + $0x58] sm:$0xff]
    %v1375 = vld [vmem:[#allocation11 + $0x60] sm:$0xff]
    %v1376 = vld [vmem:[#allocation11 + $0x68] sm:$0xff]
    %v1377 = vld [vmem:[#allocation11 + $0x70] sm:$0xff]
    %v1378 = vld [vmem:[#allocation11 + $0x78] sm:$0xff]
    %1379 = vmatprep.subr.mxu0 0.0
    %1380 = vmatpush1.msra.mxu0 %v1285
    %1381 = vmatprep.subr.mxu0 0.0
    %1382 = vmatpush1.msra.mxu0 %v1288
    %1383 = vmatprep.subr.mxu0 0.0
    %1384 = vmatpush1.msra.mxu0 %v1293
    %1385 = vmatprep.subr.mxu0 0.0
    %1386 = vmatpush1.msra.mxu0 %v1296
    %1387 = vmatprep.subr.mxu0 0.0
    %1388 = vmatpush1.msra.mxu0 %v1301
    %1389 = vmatprep.subr.mxu0 0.0
    %1390 = vmatpush1.msra.mxu0 %v1304
    %1391 = vmatprep.subr.mxu0 0.0
    %1392 = vmatpush1.msra.mxu0 %v1309
    %1393 = vmatprep.subr.mxu0 0.0
    %1394 = vmatpush1.msra.mxu0 %v1312
    %1395 = vmatprep.subr.mxu0 0.0
    %1396 = vmatpush1.msra.mxu0 %v1317
    %1397 = vmatprep.subr.mxu0 0.0
    %1398 = vmatpush1.msra.mxu0 %v1320
    %1399 = vmatprep.subr.mxu0 0.0
    %1400 = vmatpush1.msra.mxu0 %v1325
    %1401 = vmatprep.subr.mxu0 0.0
    %1402 = vmatpush1.msra.mxu0 %v1328
    %1403 = vmatprep.subr.mxu0 0.0
    %1404 = vmatpush1.msra.mxu0 %v1333
    %1405 = vmatprep.subr.mxu0 0.0
    %1406 = vmatpush1.msra.mxu0 %v1336
    %1407 = vmatprep.subr.mxu0 0.0
    %1408 = vmatpush1.msra.mxu0 %v1341
    %1409 = vmatprep.subr.mxu0 0.0
    %1410 = vmatpush1.msra.mxu0 %v1344
    %1411 = vmatprep.subr.mxu0 0.0
    %1412 = vmatpush1.msra.mxu0 0.0
    %1413 = vmatprep.subr.mxu0 0.0
    %1414 = vmatpush1.msra.mxu0 0.0
    %1415 = vmatprep.subr.mxu0 0.0
    %1416 = vmatpush1.msra.mxu0 0.0
    %1417 = vmatprep.subr.mxu0 0.0
    %1418 = vmatpush1.msra.mxu0 0.0
    %1419 = vmatprep.subr.mxu0 0.0
    %1420 = vmatpush1.msra.mxu0 0.0
    %1421 = vmatprep.subr.mxu0 0.0
    %1422 = vmatpush1.msra.mxu0 0.0
    %1423 = vmatprep.subr.mxu0 0.0
    %1424 = vmatpush1.msra.mxu0 0.0
    %1425 = vmatprep.subr.mxu0 0.0
    %1426 = vmatpush1.msra.mxu0 0.0
    %1427 = vmatprep.subr.mxu0 0.0
    %1428 = vmatpush1.msra.mxu0 0.0
    %1429 = vmatprep.subr.mxu0 0.0
    %1430 = vmatpush1.msra.mxu0 0.0
    %1431 = vmatprep.subr.mxu0 0.0
    %1432 = vmatpush1.msra.mxu0 0.0
    %1433 = vmatprep.subr.mxu0 0.0
    %1434 = vmatpush1.msra.mxu0 0.0
    %1435 = vmatprep.subr.mxu0 0.0
    %1436 = vmatpush1.msra.mxu0 0.0
    %1437 = vmatprep.subr.mxu0 0.0
    %1438 = vmatpush1.msra.mxu0 0.0
    %1439 = vmatprep.subr.mxu0 0.0
    %1440 = vmatpush1.msra.mxu0 0.0
    %1441 = vmatprep.subr.mxu0 0.0
    %1442 = vmatpush1.msra.mxu0 0.0
    %1443 = vmatprep.mubr.f32.mxu0 0.0
    %1444 = vmatmul.mubr.f32.gmra.mrb[0].mxu0 %v1363
    %v1445 = vpop.f32.mrb[0].mxu0
    %v1446 = vadd.f32 0.0, %v1445
    %v1447 = vpop.f32.mrb[0].mxu0
    %1448 = vmatprep.mubr.f32.mxu0 0.0
    %1449 = vmatmul.mubr.f32.gmra.mrb[0].mxu0 %v1364
    %v1450 = vpop.f32.mrb[0].mxu0
    %v1451 = vadd.f32 0.0, %v1450
    %v1452 = vpop.f32.mrb[0].mxu0
    %1453 = vmatprep.mubr.f32.mxu0 0.0
    %1454 = vmatmul.mubr.f32.gmra.mrb[0].mxu0 %v1365
    %v1455 = vpop.f32.mrb[0].mxu0
    %v1456 = vadd.f32 0.0, %v1455
    %v1457 = vpop.f32.mrb[0].mxu0
    %1458 = vmatprep.mubr.f32.mxu0 0.0
    %1459 = vmatmul.mubr.f32.gmra.mrb[0].mxu0 %v1366
    %v1460 = vpop.f32.mrb[0].mxu0
    %v1461 = vadd.f32 0.0, %v1460
    %v1462 = vpop.f32.mrb[0].mxu0
    %1463 = vmatprep.mubr.f32.mxu0 0.0
    %1464 = vmatmul.mubr.f32.gmra.mrb[0].mxu0 %v1367
    %v1465 = vpop.f32.mrb[0].mxu0
    %v1466 = vadd.f32 0.0, %v1465
    %v1467 = vpop.f32.mrb[0].mxu0
    %1468 = vmatprep.mubr.f32.mxu0 0.0
    %1469 = vmatmul.mubr.f32.gmra.mrb[0].mxu0 %v1368
    %v1470 = vpop.f32.mrb[0].mxu0
    %v1471 = vadd.f32 0.0, %v1470
    %v1472 = vpop.f32.mrb[0].mxu0
    %1473 = vmatprep.mubr.f32.mxu0 0.0
    %1474 = vmatmul.mubr.f32.gmra.mrb[0].mxu0 %v1369
    %v1475 = vpop.f32.mrb[0].mxu0
    %v1476 = vadd.f32 0.0, %v1475
    %v1477 = vpop.f32.mrb[0].mxu0
    %1478 = vmatprep.mubr.f32.mxu0 0.0
    %1479 = vmatmul.mubr.f32.gmra.mrb[0].mxu0 %v1370
    %v1480 = vpop.f32.mrb[0].mxu0
    %v1481 = vadd.f32 0.0, %v1480
    %v1482 = vpop.f32.mrb[0].mxu0
    %1483 = vmatprep.mubr.f32.mxu0 0.0
    %1484 = vmatmul.mubr.f32.gmra.mrb[0].mxu0 %v1371
    %v1485 = vpop.f32.mrb[0].mxu0
    %v1486 = vadd.f32 0.0, %v1485
    %v1487 = vpop.f32.mrb[0].mxu0
    %1488 = vmatprep.mubr.f32.mxu0 0.0
    %1489 = vmatmul.mubr.f32.gmra.mrb[0].mxu0 %v1372
    %v1490 = vpop.f32.mrb[0].mxu0
    %v1491 = vadd.f32 0.0, %v1490
    %v1492 = vpop.f32.mrb[0].mxu0
    %1493 = vmatprep.mubr.f32.mxu0 0.0
    %1494 = vmatmul.mubr.f32.gmra.mrb[0].mxu0 %v1373
    %v1495 = vpop.f32.mrb[0].mxu0
    %v1496 = vadd.f32 0.0, %v1495
    %v1497 = vpop.f32.mrb[0].mxu0
    %1498 = vmatprep.mubr.f32.mxu0 0.0
    %1499 = vmatmul.mubr.f32.gmra.mrb[0].mxu0 %v1374
    %v1500 = vpop.f32.mrb[0].mxu0
    %v1501 = vadd.f32 0.0, %v1500
    %v1502 = vpop.f32.mrb[0].mxu0
    %1503 = vmatprep.mubr.f32.mxu0 0.0
    %1504 = vmatmul.mubr.f32.gmra.mrb[0].mxu0 %v1375
    %v1505 = vpop.f32.mrb[0].mxu0
    %v1506 = vadd.f32 0.0, %v1505
    %v1507 = vpop.f32.mrb[0].mxu0
    %1508 = vmatprep.mubr.f32.mxu0 0.0
    %1509 = vmatmul.mubr.f32.gmra.mrb[0].mxu0 %v1376
    %v1510 = vpop.f32.mrb[0].mxu0
    %v1511 = vadd.f32 0.0, %v1510
    %v1512 = vpop.f32.mrb[0].mxu0
    %1513 = vmatprep.mubr.f32.mxu0 0.0
    %1514 = vmatmul.mubr.f32.gmra.mrb[0].mxu0 %v1377
    %v1515 = vpop.f32.mrb[0].mxu0
    %v1516 = vadd.f32 0.0, %v1515
    %v1517 = vpop.f32.mrb[0].mxu0
    %1518 = vmatprep.mubr.f32.mxu0 0.0
    %1519 = vmatmul.mubr.f32.gmra.mrb[0].mxu0 %v1378
    %v1520 = vpop.f32.mrb[0].mxu0
    %v1521 = vadd.f32 0.0, %v1520
    %v1522 = vpop.f32.mrb[0].mxu0
    %1523 = vdwg.mxu0
    %v1524 = vld [vmem:[#allocation13] sm:$0xff]
    %v1525 = vld [vmem:[#allocation13 + $0x8] sm:$0xff]
    %v1526 = vld [vmem:[#allocation13 + $0x10] sm:$0xff]
    %v1527 = vld [vmem:[#allocation13 + $0x18] sm:$0xff]
    %v1528 = vld [vmem:[#allocation13 + $0x20] sm:$0xff]
    %v1529 = vld [vmem:[#allocation13 + $0x28] sm:$0xff]
    %v1530 = vld [vmem:[#allocation13 + $0x30] sm:$0xff]
    %v1531 = vld [vmem:[#allocation13 + $0x38] sm:$0xff]
    %v1532 = vld [vmem:[#allocation13 + $0x40] sm:$0xff]
    %v1533 = vld [vmem:[#allocation13 + $0x48] sm:$0xff]
    %v1534 = vld [vmem:[#allocation13 + $0x50] sm:$0xff]
    %v1535 = vld [vmem:[#allocation13 + $0x58] sm:$0xff]
    %v1536 = vld [vmem:[#allocation13 + $0x60] sm:$0xff]
    %v1537 = vld [vmem:[#allocation13 + $0x68] sm:$0xff]
    %v1538 = vld [vmem:[#allocation13 + $0x70] sm:$0xff]
    %v1539 = vld [vmem:[#allocation13 + $0x78] sm:$0xff]
    %1540 = vmatprep.subr.mxu0 0.0
    %1541 = vmatpush1.msra.mxu0 %v1285
    %1542 = vmatprep.subr.mxu0 0.0
    %1543 = vmatpush1.msra.mxu0 %v1288
    %1544 = vmatprep.subr.mxu0 0.0
    %1545 = vmatpush1.msra.mxu0 %v1293
    %1546 = vmatprep.subr.mxu0 0.0
    %1547 = vmatpush1.msra.mxu0 %v1296
    %1548 = vmatprep.subr.mxu0 0.0
    %1549 = vmatpush1.msra.mxu0 %v1301
    %1550 = vmatprep.subr.mxu0 0.0
    %1551 = vmatpush1.msra.mxu0 %v1304
    %1552 = vmatprep.subr.mxu0 0.0
    %1553 = vmatpush1.msra.mxu0 %v1309
    %1554 = vmatprep.subr.mxu0 0.0
    %1555 = vmatpush1.msra.mxu0 %v1312
    %1556 = vmatprep.subr.mxu0 0.0
    %1557 = vmatpush1.msra.mxu0 %v1317
    %1558 = vmatprep.subr.mxu0 0.0
    %1559 = vmatpush1.msra.mxu0 %v1320
    %1560 = vmatprep.subr.mxu0 0.0
    %1561 = vmatpush1.msra.mxu0 %v1325
    %1562 = vmatprep.subr.mxu0 0.0
    %1563 = vmatpush1.msra.mxu0 %v1328
    %1564 = vmatprep.subr.mxu0 0.0
    %1565 = vmatpush1.msra.mxu0 %v1333
    %1566 = vmatprep.subr.mxu0 0.0
    %1567 = vmatpush1.msra.mxu0 %v1336
    %1568 = vmatprep.subr.mxu0 0.0
    %1569 = vmatpush1.msra.mxu0 %v1341
    %1570 = vmatprep.subr.mxu0 0.0
    %1571 = vmatpush1.msra.mxu0 %v1344
    %1572 = vmatprep.subr.mxu0 0.0
    %1573 = vmatpush1.msra.mxu0 0.0
    %1574 = vmatprep.subr.mxu0 0.0
    %1575 = vmatpush1.msra.mxu0 0.0
    %1576 = vmatprep.subr.mxu0 0.0
    %1577 = vmatpush1.msra.mxu0 0.0
    %1578 = vmatprep.subr.mxu0 0.0
    %1579 = vmatpush1.msra.mxu0 0.0
    %1580 = vmatprep.subr.mxu0 0.0
    %1581 = vmatpush1.msra.mxu0 0.0
    %1582 = vmatprep.subr.mxu0 0.0
    %1583 = vmatpush1.msra.mxu0 0.0
    %1584 = vmatprep.subr.mxu0 0.0
    %1585 = vmatpush1.msra.mxu0 0.0
    %1586 = vmatprep.subr.mxu0 0.0
    %1587 = vmatpush1.msra.mxu0 0.0
    %1588 = vmatprep.subr.mxu0 0.0
    %1589 = vmatpush1.msra.mxu0 0.0
    %1590 = vmatprep.subr.mxu0 0.0
    %1591 = vmatpush1.msra.mxu0 0.0
    %1592 = vmatprep.subr.mxu0 0.0
    %1593 = vmatpush1.msra.mxu0 0.0
    %1594 = vmatprep.subr.mxu0 0.0
    %1595 = vmatpush1.msra.mxu0 0.0
    %1596 = vmatprep.subr.mxu0 0.0
    %1597 = vmatpush1.msra.mxu0 0.0
    %1598 = vmatprep.subr.mxu0 0.0
    %1599 = vmatpush1.msra.mxu0 0.0
    %1600 = vmatprep.subr.mxu0 0.0
    %1601 = vmatpush1.msra.mxu0 0.0
    %1602 = vmatprep.subr.mxu0 0.0
    %1603 = vmatpush1.msra.mxu0 0.0
    %1604 = vmatprep.mubr.f32.mxu0 0.0
    %1605 = vmatmul.mubr.f32.gmra.mrb[0].mxu0 %v1524
    %v1606 = vpop.f32.mrb[0].mxu0
    %v1607 = vadd.f32 0.0, %v1606
    %v1608 = vpop.f32.mrb[0].mxu0
    %1609 = vmatprep.mubr.f32.mxu0 0.0
    %1610 = vmatmul.mubr.f32.gmra.mrb[0].mxu0 %v1525
    %v1611 = vpop.f32.mrb[0].mxu0
    %v1612 = vadd.f32 0.0, %v1611
    %v1613 = vpop.f32.mrb[0].mxu0
    %1614 = vmatprep.mubr.f32.mxu0 0.0
    %1615 = vmatmul.mubr.f32.gmra.mrb[0].mxu0 %v1526
    %v1616 = vpop.f32.mrb[0].mxu0
    %v1617 = vadd.f32 0.0, %v1616
    %v1618 = vpop.f32.mrb[0].mxu0
    %1619 = vmatprep.mubr.f32.mxu0 0.0
    %1620 = vmatmul.mubr.f32.gmra.mrb[0].mxu0 %v1527
    %v1621 = vpop.f32.mrb[0].mxu0
    %v1622 = vadd.f32 0.0, %v1621
    %v1623 = vpop.f32.mrb[0].mxu0
    %1624 = vmatprep.mubr.f32.mxu0 0.0
    %1625 = vmatmul.mubr.f32.gmra.mrb[0].mxu0 %v1528
    %v1626 = vpop.f32.mrb[0].mxu0
    %v1627 = vadd.f32 0.0, %v1626
    %v1628 = vpop.f32.mrb[0].mxu0
    %1629 = vmatprep.mubr.f32.mxu0 0.0
    %1630 = vmatmul.mubr.f32.gmra.mrb[0].mxu0 %v1529
    %v1631 = vpop.f32.mrb[0].mxu0
    %v1632 = vadd.f32 0.0, %v1631
    %v1633 = vpop.f32.mrb[0].mxu0
    %1634 = vmatprep.mubr.f32.mxu0 0.0
    %1635 = vmatmul.mubr.f32.gmra.mrb[0].mxu0 %v1530
    %v1636 = vpop.f32.mrb[0].mxu0
    %v1637 = vadd.f32 0.0, %v1636
    %v1638 = vpop.f32.mrb[0].mxu0
    %1639 = vmatprep.mubr.f32.mxu0 0.0
    %1640 = vmatmul.mubr.f32.gmra.mrb[0].mxu0 %v1531
    %v1641 = vpop.f32.mrb[0].mxu0
    %v1642 = vadd.f32 0.0, %v1641
    %v1643 = vpop.f32.mrb[0].mxu0
    %1644 = vmatprep.mubr.f32.mxu0 0.0
    %1645 = vmatmul.mubr.f32.gmra.mrb[0].mxu0 %v1532
    %v1646 = vpop.f32.mrb[0].mxu0
    %v1647 = vadd.f32 0.0, %v1646
    %v1648 = vpop.f32.mrb[0].mxu0
    %1649 = vmatprep.mubr.f32.mxu0 0.0
    %1650 = vmatmul.mubr.f32.gmra.mrb[0].mxu0 %v1533
    %v1651 = vpop.f32.mrb[0].mxu0
    %v1652 = vadd.f32 0.0, %v1651
    %v1653 = vpop.f32.mrb[0].mxu0
    %1654 = vmatprep.mubr.f32.mxu0 0.0
    %1655 = vmatmul.mubr.f32.gmra.mrb[0].mxu0 %v1534
    %v1656 = vpop.f32.mrb[0].mxu0
    %v1657 = vadd.f32 0.0, %v1656
    %v1658 = vpop.f32.mrb[0].mxu0
    %1659 = vmatprep.mubr.f32.mxu0 0.0
    %1660 = vmatmul.mubr.f32.gmra.mrb[0].mxu0 %v1535
    %v1661 = vpop.f32.mrb[0].mxu0
    %v1662 = vadd.f32 0.0, %v1661
    %v1663 = vpop.f32.mrb[0].mxu0
    %1664 = vmatprep.mubr.f32.mxu0 0.0
    %1665 = vmatmul.mubr.f32.gmra.mrb[0].mxu0 %v1536
    %v1666 = vpop.f32.mrb[0].mxu0
    %v1667 = vadd.f32 0.0, %v1666
    %v1668 = vpop.f32.mrb[0].mxu0
    %1669 = vmatprep.mubr.f32.mxu0 0.0
    %1670 = vmatmul.mubr.f32.gmra.mrb[0].mxu0 %v1537
    %v1671 = vpop.f32.mrb[0].mxu0
    %v1672 = vadd.f32 0.0, %v1671
    %v1673 = vpop.f32.mrb[0].mxu0
    %1674 = vmatprep.mubr.f32.mxu0 0.0
    %1675 = vmatmul.mubr.f32.gmra.mrb[0].mxu0 %v1538
    %v1676 = vpop.f32.mrb[0].mxu0
    %v1677 = vadd.f32 0.0, %v1676
    %v1678 = vpop.f32.mrb[0].mxu0
    %1679 = vmatprep.mubr.f32.mxu0 0.0
    %1680 = vmatmul.mubr.f32.gmra.mrb[0].mxu0 %v1539
    %v1681 = vpop.f32.mrb[0].mxu0
    %v1682 = vadd.f32 0.0, %v1681
    %v1683 = vpop.f32.mrb[0].mxu0
    %1684 = vdwg.mxu0
    %v1685 = vmul.f32 %v1446, %v1607
    %v1686 = vmul.f32 %v1451, %v1612
    %v1687 = vmul.f32 %v1456, %v1617
    %v1688 = vmul.f32 %v1461, %v1622
    %v1689 = vmul.f32 %v1466, %v1627
    %v1690 = vmul.f32 %v1471, %v1632
    %v1691 = vmul.f32 %v1476, %v1637
    %v1692 = vmul.f32 %v1481, %v1642
    %v1693 = vmul.f32 %v1486, %v1647
    %v1694 = vmul.f32 %v1491, %v1652
    %v1695 = vmul.f32 %v1496, %v1657
    %v1696 = vmul.f32 %v1501, %v1662
    %v1697 = vmul.f32 %v1506, %v1667
    %v1698 = vmul.f32 %v1511, %v1672
    %v1699 = vmul.f32 %v1516, %v1677
    %v1700 = vmul.f32 %v1521, %v1682
    %1701 = vadd.xlane.f32.xlu0 %v1685
    %v1702 = vpop.xlane.xlu0 %1701
    %1703 = vadd.xlane.f32.xlu0 %v1686
    %v1704 = vpop.xlane.xlu0 %1703
    %1705 = vadd.xlane.f32.xlu0 %v1687
    %v1706 = vpop.xlane.xlu0 %1705
    %1707 = vadd.xlane.f32.xlu0 %v1688
    %v1708 = vpop.xlane.xlu0 %1707
    %1709 = vadd.xlane.f32.xlu0 %v1689
    %v1710 = vpop.xlane.xlu0 %1709
    %1711 = vadd.xlane.f32.xlu0 %v1690
    %v1712 = vpop.xlane.xlu0 %1711
    %1713 = vadd.xlane.f32.xlu0 %v1691
    %v1714 = vpop.xlane.xlu0 %1713
    %1715 = vadd.xlane.f32.xlu0 %v1692
    %v1716 = vpop.xlane.xlu0 %1715
    %1717 = vadd.xlane.f32.xlu0 %v1693
    %v1718 = vpop.xlane.xlu0 %1717
    %1719 = vadd.xlane.f32.xlu0 %v1694
    %v1720 = vpop.xlane.xlu0 %1719
    %1721 = vadd.xlane.f32.xlu0 %v1695
    %v1722 = vpop.xlane.xlu0 %1721
    %1723 = vadd.xlane.f32.xlu0 %v1696
    %v1724 = vpop.xlane.xlu0 %1723
    %1725 = vadd.xlane.f32.xlu0 %v1697
    %v1726 = vpop.xlane.xlu0 %1725
    %1727 = vadd.xlane.f32.xlu0 %v1698
    %v1728 = vpop.xlane.xlu0 %1727
    %1729 = vadd.xlane.f32.xlu0 %v1699
    %v1730 = vpop.xlane.xlu0 %1729
    %1731 = vadd.xlane.f32.xlu0 %v1700
    %v1732 = vpop.xlane.xlu0 %1731
    %vm1733 = vcmask 7168
    %1734 = vst.msk [vmem:[%s8] sm:$0xff] %vm1733, %v1702
    %1735 = vst.msk [vmem:[%s8 + $0x8] sm:$0xff] %vm1733, %v1704
    %1736 = vst.msk [vmem:[%s8 + $0x10] sm:$0xff] %vm1733, %v1706
    %1737 = vst.msk [vmem:[%s8 + $0x18] sm:$0xff] %vm1733, %v1708
    %1738 = vst.msk [vmem:[%s8 + $0x20] sm:$0xff] %vm1733, %v1710
    %1739 = vst.msk [vmem:[%s8 + $0x28] sm:$0xff] %vm1733, %v1712
    %1740 = vst.msk [vmem:[%s8 + $0x30] sm:$0xff] %vm1733, %v1714
    %1741 = vst.msk [vmem:[%s8 + $0x38] sm:$0xff] %vm1733, %v1716
    %1742 = vst.msk [vmem:[%s8 + $0x40] sm:$0xff] %vm1733, %v1718
    %1743 = vst.msk [vmem:[%s8 + $0x48] sm:$0xff] %vm1733, %v1720
    %1744 = vst.msk [vmem:[%s8 + $0x50] sm:$0xff] %vm1733, %v1722
    %1745 = vst.msk [vmem:[%s8 + $0x58] sm:$0xff] %vm1733, %v1724
    %1746 = vst.msk [vmem:[%s8 + $0x60] sm:$0xff] %vm1733, %v1726
    %1747 = vst.msk [vmem:[%s8 + $0x68] sm:$0xff] %vm1733, %v1728
    %1748 = vst.msk [vmem:[%s8 + $0x70] sm:$0xff] %vm1733, %v1730
    %1749 = vst.msk [vmem:[%s8 + $0x78] sm:$0xff] %vm1733, %v1732
    // Predicated region
    $region58: #{tpu_custom_call.1} parent=1 // pred_check
      _
    $region59: #{tpu_custom_call.1} parent=1 // pred_check_branch
      %1751 = sbr.rel (0) target = $region61
    $region60: #{tpu_custom_call.1} parent=1 // pred_region
      %s1753 = ssub.s32 2048, 2048
      %1754 = vsyncadd [#allocation4], %s1753
      %s1755 = sshll.u32 [#allocation14], 4
      %s1756 = int_to_ptr.vmem [resolvable:$true] %s1755
      %1761 = dma.vmem_to_hbm [thread:$0]  %s1756, 2048, %s7, [#allocation4], 128, 128, 8
    $region61: #{tpu_custom_call.1} parent=1 // pred_fallthru
      _
    // Predicated region
    $region62: #{tpu_custom_call.1} parent=1 // pred_check
      _
    $region63: #{tpu_custom_call.1} parent=1 // pred_check_branch
      %1763 = sbr.rel (0) target = $region65
    $region64: #{tpu_custom_call.1} parent=1 // pred_region
      _
    $region65: #{tpu_custom_call.1} parent=1 // pred_fallthru
      _
    // Predicated region
    $region66: #{tpu_custom_call.1} parent=1 // pred_check
      _
    $region67: #{tpu_custom_call.1} parent=1 // pred_check_branch
      %1765 = sbr.rel (0) target = $region69
    $region68: #{tpu_custom_call.1} parent=1 // pred_region
      %1766 = dma.done [#allocation4], 2048
    $region69: #{tpu_custom_call.1} parent=1 // pred_fallthru
      _
    // Predicated region
    $region70: #{tpu_custom_call.1} parent=1 // pred_check
      _
    $region71: #{tpu_custom_call.1} parent=1 // pred_check_branch
      %1768 = sbr.rel (0) target = $region73
    $region72: #{tpu_custom_call.1} parent=1 // pred_region
      _
    $region73: #{tpu_custom_call.1} parent=1 // pred_fallthru
      _
    %1769 = vsyncpa [#allocation3], 1
    %1770 = vsyncpa [#allocation6], 1
    %1771 = vsyncpa [#allocation9], 1
    %1772 = vsyncpa [#allocation12], 1
    %1773 = vsyncpa [#allocation4], 1

</llo_original>
